<compile_context>
chip_gen: v7x
topology: tpu7x:2x2x1
jax: 0.10.0
libtpu: 0.0.40
codegen_flags: <defaults>
</compile_context>

<pallas_src>
import functools

import jax
import jax.numpy as jnp
from jax.experimental import pallas as pl
from jax.experimental.pallas import tpu as pltpu

BN_EPS = 1e-5
LANE = 128


def _round_up(n, m=LANE):
    return ((n + m - 1) // m) * m


def _pad2(x, rows, cols):
    r, c = x.shape
    return jnp.pad(x, ((0, rows - r), (0, cols - c)))


# ------------------------------- kernel ------------------------------------


def _bn_relu(h, gamma, beta):
    """Training-mode BatchNorm1d + ReLU, fused (f32 in / f32 out).

    One reduction pass (sum, sum of squares), then a single scale/shift FMA.
    """
    inv_n = 1.0 / h.shape[0]
    mean = jnp.sum(h, axis=0, keepdims=True) * inv_n
    mean_sq = jnp.sum(h * h, axis=0, keepdims=True) * inv_n
    var = jnp.maximum(mean_sq - mean * mean, 0.0)
    scale = gamma * jax.lax.rsqrt(var + BN_EPS)
    shift = beta - mean * scale
    return jnp.maximum(h * scale + shift, 0.0)


def make_deepddi_kernel(num_hidden):
    """Kernel ref order:
       drugs_a, drugs_b,
       w1a, w1b, gamma1, beta1,                       # first hidden layer (split W)
       [w_i, gamma_i, beta_i] * (num_hidden - 1),     # remaining hidden layers
       w_out, b_out,
       out
    All weights bf16 (in_pad, out_pad); gamma/beta/b_out f32 (1, out_pad).
    """
    assert num_hidden >= 1

    def kernel(*refs):
        a_ref, b_ref = refs[0], refs[1]
        out_ref = refs[-1]
        p = refs[2:-1]

        # Layer 1: split matmul avoids materializing concat(drugs_a, drugs_b).
        w1a, w1b, g, be = p[0], p[1], p[2], p[3]
        h = jnp.dot(a_ref[...], w1a[...], preferred_element_type=jnp.float32)
        h = h + jnp.dot(b_ref[...], w1b[...], preferred_element_type=jnp.float32)
        h = _bn_relu(h, g[...], be[...])

        idx = 4
        for _ in range(num_hidden - 1):
            w, g, be = p[idx], p[idx + 1], p[idx + 2]
            idx += 3
            h = jnp.dot(h.astype(jnp.bfloat16), w[...],
                        preferred_element_type=jnp.float32)
            h = _bn_relu(h, g[...], be[...])

        w_out, b_out = p[idx], p[idx + 1]
        logits = jnp.dot(h.astype(jnp.bfloat16), w_out[...],
                         preferred_element_type=jnp.float32) + b_out[...]
        out_ref[...] = jax.nn.sigmoid(logits)

    return kernel


# ------------------------------ wrapper -------------------------------------


@functools.partial(jax.jit, static_argnames=("output_dim", "num_hidden"))
def deepddi_forward(drugs_a, drugs_b, kernel_params, output_dim, num_hidden):
    batch, da = drugs_a.shape
    _, db = drugs_b.shape
    da_p, db_p = _round_up(da), _round_up(db)

    # Zero-pad drug features to lane-aligned widths and cast to bf16 for the MXU.
    a = jnp.pad(drugs_a.astype(jnp.bfloat16), ((0, 0), (0, da_p - da)))
    b = jnp.pad(drugs_b.astype(jnp.bfloat16), ((0, 0), (0, db_p - db)))

    out_pad = kernel_params[-1].shape[-1]  # padded output width (multiple of 128)
    kernel = make_deepddi_kernel(num_hidden)
    n_in = 2 + len(kernel_params)

    # Explicit scoped-VMEM budget: params + activations + headroom (capped).
    vmem_bytes = sum(int(x.size) * x.dtype.itemsize for x in (a, b, *kernel_params))
    vmem_bytes += batch * out_pad * 4
    vmem_bytes = min(2 * vmem_bytes + (8 << 20), 64 << 20)

    out = pl.pallas_call(
        kernel,
        out_shape=jax.ShapeDtypeStruct((batch, out_pad), jnp.float32),
        in_specs=[pl.BlockSpec(memory_space=pltpu.MemorySpace.VMEM)] * n_in,
        out_specs=pl.BlockSpec(memory_space=pltpu.MemorySpace.VMEM),
        compiler_params=pltpu.CompilerParams(vmem_limit_bytes=vmem_bytes),
    )(a, b, *kernel_params)

    # Slice the lane-padded output back to the real number of side effects.
    return out[:, :output_dim]


# --------------------------- params & reference -----------------------------


def init_deepddi_params(key, da, db, hidden_sizes, output_dim):
    """PyTorch-style f32 params: nn.Linear U[-1/sqrt(in), 1/sqrt(in)], BN gamma=1, beta=0."""
    params = {"hidden": []}
    in_ = da + db
    for out_ in hidden_sizes:
        key, kw, kb = jax.random.split(key, 3)
        bound = 1.0 / float(in_) ** 0.5
        w = jax.random.uniform(kw, (in_, out_), jnp.float32, -bound, bound)
        bias = jax.random.uniform(kb, (out_,), jnp.float32, -bound, bound)
        gamma = jnp.ones((out_,), jnp.float32)
        beta = jnp.zeros((out_,), jnp.float32)
        params["hidden"].append((w, bias, gamma, beta))
        in_ = out_
    key, kw, kb = jax.random.split(key, 3)
    bound = 1.0 / float(in_) ** 0.5
    params["out_w"] = jax.random.uniform(kw, (in_, output_dim), jnp.float32, -bound, bound)
    params["out_b"] = jax.random.uniform(kb, (output_dim,), jnp.float32, -bound, bound)
    return params


def pack_params(params, da, db):
    """Kernel layout: pad to lane multiples, cast weights to bf16, drop hidden
    biases (exactly cancelled by training-mode BN mean subtraction), split the
    first weight into (W1a, W1b)."""
    da_p, db_p = _round_up(da), _round_up(db)
    flat = []

    w1, _b1, g1, be1 = params["hidden"][0]
    h1_p = _round_up(w1.shape[1])
    flat += [
        _pad2(w1[:da], da_p, h1_p).astype(jnp.bfloat16),
        _pad2(w1[da:], db_p, h1_p).astype(jnp.bfloat16),
        _pad2(g1.reshape(1, -1), 1, h1_p),
        _pad2(be1.reshape(1, -1), 1, h1_p),
    ]
    in_p = h1_p
    for (w, _b, g, be) in params["hidden"][1:]:
        out_p = _round_up(w.shape[1])
        flat += [
            _pad2(w, in_p, out_p).astype(jnp.bfloat16),
            _pad2(g.reshape(1, -1), 1, out_p),
            _pad2(be.reshape(1, -1), 1, out_p),
        ]
        in_p = out_p

    w_o, b_o = params["out_w"], params["out_b"]
    o_p = _round_up(w_o.shape[1])
    flat += [
        _pad2(w_o, in_p, o_p).astype(jnp.bfloat16),
        _pad2(b_o.reshape(1, -1), 1, o_p),
    ]
    return tuple(flat)


def reference_forward(drugs_a, drugs_b, params):
    """Pure-JAX f32 reference matching the PyTorch module."""
    x = jnp.concatenate([drugs_a, drugs_b], axis=1).astype(jnp.float32)
    for (w, bias, gamma, beta) in params["hidden"]:
        h = x @ w + bias
        mean = jnp.mean(h, axis=0, keepdims=True)
        var = jnp.mean((h - mean) ** 2, axis=0, keepdims=True)
        h = (h - mean) * jax.lax.rsqrt(var + BN_EPS) * gamma + beta
        x = jnp.maximum(h, 0.0)
    logits = x @ params["out_w"] + params["out_b"]
    return jax.nn.sigmoid(logits)


# --------------------------------- demo --------------------------------------


if __name__ == "__main__":
    # MXU-friendly demo shapes: batch fills the systolic rows; feature widths
    # are deliberately "awkward" and get lane-padded inside the wrapper.
    batch = 128
    drug_feat_dim = 50            # per-drug feature dim (pads to 128)
    hidden_sizes = (200, 100)     # pad to (256, 128)
    nb_side_effects = 86          # real-DeepDDI-ish output_dim (pads to 128)

    key = jax.random.PRNGKey(0)
    key, ka, kb, kp = jax.random.split(key, 4)
    drugs_a = jax.random.uniform(ka, (batch, drug_feat_dim), jnp.float32)
    drugs_b = jax.random.uniform(kb, (batch, drug_feat_dim), jnp.float32)

    params = init_deepddi_params(kp, drug_feat_dim, drug_feat_dim,
                                 hidden_sizes, nb_side_effects)
    kparams = pack_params(params, drug_feat_dim, drug_feat_dim)

    out = deepddi_forward(
        drugs_a, drugs_b, kparams,
        output_dim=nb_side_effects,
        num_hidden=len(hidden_sizes),
    )
    out = jax.block_until_ready(out)

    assert out.shape == (batch, nb_side_effects)
    assert bool(jnp.all(jnp.isfinite(out)))
    assert bool(jnp.all((out >= 0.0) & (out <= 1.0)))

    # Compare against the f32 reference (bf16 MXU operands => loose tolerance).
    ref = reference_forward(drugs_a, drugs_b, params)
    max_err = float(jnp.max(jnp.abs(out - ref)))
    assert max_err < 5e-2, f"max |out - ref| = {max_err}"

    print("KERNEL_OK")
</pallas_src>

<mosaic_0001>
module attributes {stable_mosaic.version = 11 : i64} {
  func.func @kernel(%arg0: memref<128x128xbf16, #tpu.memory_space<vmem>>, %arg1: memref<128x128xbf16, #tpu.memory_space<vmem>>, %arg2: memref<128x256xbf16, #tpu.memory_space<vmem>>, %arg3: memref<128x256xbf16, #tpu.memory_space<vmem>>, %arg4: memref<1x256xf32, #tpu.memory_space<vmem>>, %arg5: memref<1x256xf32, #tpu.memory_space<vmem>>, %arg6: memref<256x128xbf16, #tpu.memory_space<vmem>>, %arg7: memref<1x128xf32, #tpu.memory_space<vmem>>, %arg8: memref<1x128xf32, #tpu.memory_space<vmem>>, %arg9: memref<128x128xbf16, #tpu.memory_space<vmem>>, %arg10: memref<1x128xf32, #tpu.memory_space<vmem>>, %arg11: memref<128x128xf32, #tpu.memory_space<vmem>>) attributes {dimension_semantics = [], scalar_prefetch = 0 : i64, scratch_operands = 0 : i64, tpu.core_type = #tpu.core_type<tc>} {
    %c0 = arith.constant 0 : index
    %c0_0 = arith.constant 0 : index
    %0 = vector.load %arg0[%c0, %c0_0] : memref<128x128xbf16, #tpu.memory_space<vmem>>, vector<128x128xbf16>
    %c0_1 = arith.constant 0 : index
    %c0_2 = arith.constant 0 : index
    %1 = vector.load %arg2[%c0_1, %c0_2] : memref<128x256xbf16, #tpu.memory_space<vmem>>, vector<128x256xbf16>
    %cst = arith.constant dense<0.000000e+00> : vector<128x256xf32>
    %2 = tpu.matmul %0, %1, %cst {dimension_numbers = #tpu.dot_dimension_numbers<[1], [0], [0], [1], [0, 0, 1, 1], [], []>} : vector<128x128xbf16>, vector<128x256xbf16>, vector<128x256xf32> -> vector<128x256xf32>
    %c0_3 = arith.constant 0 : index
    %c0_4 = arith.constant 0 : index
    %3 = vector.load %arg1[%c0_3, %c0_4] : memref<128x128xbf16, #tpu.memory_space<vmem>>, vector<128x128xbf16>
    %c0_5 = arith.constant 0 : index
    %c0_6 = arith.constant 0 : index
    %4 = vector.load %arg3[%c0_5, %c0_6] : memref<128x256xbf16, #tpu.memory_space<vmem>>, vector<128x256xbf16>
    %cst_7 = arith.constant dense<0.000000e+00> : vector<128x256xf32>
    %5 = tpu.matmul %3, %4, %cst_7 {dimension_numbers = #tpu.dot_dimension_numbers<[1], [0], [0], [1], [0, 0, 1, 1], [], []>} : vector<128x128xbf16>, vector<128x256xbf16>, vector<128x256xf32> -> vector<128x256xf32>
    %6 = arith.addf %2, %5 : vector<128x256xf32>
    %c0_8 = arith.constant 0 : index
    %c0_9 = arith.constant 0 : index
    %7 = vector.load %arg4[%c0_8, %c0_9] : memref<1x256xf32, #tpu.memory_space<vmem>>, vector<1x256xf32>
    %c0_10 = arith.constant 0 : index
    %c0_11 = arith.constant 0 : index
    %8 = vector.load %arg5[%c0_10, %c0_11] : memref<1x256xf32, #tpu.memory_space<vmem>>, vector<1x256xf32>
    %cst_12 = arith.constant dense<0.000000e+00> : vector<256xf32>
    %9 = vector.multi_reduction <add>, %6, %cst_12 [0] : vector<128x256xf32> to vector<256xf32>
    %10 = vector.shape_cast %9 : vector<256xf32> to vector<1x256xf32>
    %cst_13 = arith.constant 7.812500e-03 : f32
    %11 = vector.broadcast %cst_13 : f32 to vector<1x256xf32>
    %12 = arith.mulf %10, %11 : vector<1x256xf32>
    %13 = arith.mulf %6, %6 : vector<128x256xf32>
    %cst_14 = arith.constant dense<0.000000e+00> : vector<256xf32>
    %14 = vector.multi_reduction <add>, %13, %cst_14 [0] : vector<128x256xf32> to vector<256xf32>
    %15 = vector.shape_cast %14 : vector<256xf32> to vector<1x256xf32>
    %cst_15 = arith.constant 7.812500e-03 : f32
    %16 = vector.broadcast %cst_15 : f32 to vector<1x256xf32>
    %17 = arith.mulf %15, %16 : vector<1x256xf32>
    %18 = arith.mulf %12, %12 : vector<1x256xf32>
    %19 = arith.subf %17, %18 : vector<1x256xf32>
    %cst_16 = arith.constant 0.000000e+00 : f32
    %20 = vector.broadcast %cst_16 : f32 to vector<1x256xf32>
    %21 = arith.maximumf %19, %20 : vector<1x256xf32>
    %cst_17 = arith.constant 9.99999974E-6 : f32
    %22 = vector.broadcast %cst_17 : f32 to vector<1x256xf32>
    %23 = arith.addf %21, %22 : vector<1x256xf32>
    %24 = math.rsqrt %23 : vector<1x256xf32>
    %25 = arith.mulf %7, %24 : vector<1x256xf32>
    %26 = arith.mulf %12, %25 : vector<1x256xf32>
    %27 = arith.subf %8, %26 : vector<1x256xf32>
    %28 = vector.broadcast %25 : vector<1x256xf32> to vector<128x256xf32>
    %29 = arith.mulf %6, %28 : vector<128x256xf32>
    %30 = vector.broadcast %27 : vector<1x256xf32> to vector<128x256xf32>
    %31 = arith.addf %29, %30 : vector<128x256xf32>
    %cst_18 = arith.constant 0.000000e+00 : f32
    %32 = vector.broadcast %cst_18 : f32 to vector<128x256xf32>
    %33 = arith.maximumf %31, %32 : vector<128x256xf32>
    %34 = arith.truncf %33 : vector<128x256xf32> to vector<128x256xbf16>
    %c0_19 = arith.constant 0 : index
    %c0_20 = arith.constant 0 : index
    %35 = vector.load %arg6[%c0_19, %c0_20] : memref<256x128xbf16, #tpu.memory_space<vmem>>, vector<256x128xbf16>
    %cst_21 = arith.constant dense<0.000000e+00> : vector<128x128xf32>
    %36 = tpu.matmul %34, %35, %cst_21 {dimension_numbers = #tpu.dot_dimension_numbers<[1], [0], [0], [1], [0, 0, 1, 1], [], []>} : vector<128x256xbf16>, vector<256x128xbf16>, vector<128x128xf32> -> vector<128x128xf32>
    %c0_22 = arith.constant 0 : index
    %c0_23 = arith.constant 0 : index
    %37 = vector.load %arg7[%c0_22, %c0_23] : memref<1x128xf32, #tpu.memory_space<vmem>>, vector<1x128xf32>
    %c0_24 = arith.constant 0 : index
    %c0_25 = arith.constant 0 : index
    %38 = vector.load %arg8[%c0_24, %c0_25] : memref<1x128xf32, #tpu.memory_space<vmem>>, vector<1x128xf32>
    %cst_26 = arith.constant dense<0.000000e+00> : vector<128xf32>
    %39 = vector.multi_reduction <add>, %36, %cst_26 [0] : vector<128x128xf32> to vector<128xf32>
    %40 = vector.shape_cast %39 : vector<128xf32> to vector<1x128xf32>
    %cst_27 = arith.constant 7.812500e-03 : f32
    %41 = vector.broadcast %cst_27 : f32 to vector<1x128xf32>
    %42 = arith.mulf %40, %41 : vector<1x128xf32>
    %43 = arith.mulf %36, %36 : vector<128x128xf32>
    %cst_28 = arith.constant dense<0.000000e+00> : vector<128xf32>
    %44 = vector.multi_reduction <add>, %43, %cst_28 [0] : vector<128x128xf32> to vector<128xf32>
    %45 = vector.shape_cast %44 : vector<128xf32> to vector<1x128xf32>
    %cst_29 = arith.constant 7.812500e-03 : f32
    %46 = vector.broadcast %cst_29 : f32 to vector<1x128xf32>
    %47 = arith.mulf %45, %46 : vector<1x128xf32>
    %48 = arith.mulf %42, %42 : vector<1x128xf32>
    %49 = arith.subf %47, %48 : vector<1x128xf32>
    %cst_30 = arith.constant 0.000000e+00 : f32
    %50 = vector.broadcast %cst_30 : f32 to vector<1x128xf32>
    %51 = arith.maximumf %49, %50 : vector<1x128xf32>
    %cst_31 = arith.constant 9.99999974E-6 : f32
    %52 = vector.broadcast %cst_31 : f32 to vector<1x128xf32>
    %53 = arith.addf %51, %52 : vector<1x128xf32>
    %54 = math.rsqrt %53 : vector<1x128xf32>
    %55 = arith.mulf %37, %54 : vector<1x128xf32>
    %56 = arith.mulf %42, %55 : vector<1x128xf32>
    %57 = arith.subf %38, %56 : vector<1x128xf32>
    %58 = vector.broadcast %55 : vector<1x128xf32> to vector<128x128xf32>
    %59 = arith.mulf %36, %58 : vector<128x128xf32>
    %60 = vector.broadcast %57 : vector<1x128xf32> to vector<128x128xf32>
    %61 = arith.addf %59, %60 : vector<128x128xf32>
    %cst_32 = arith.constant 0.000000e+00 : f32
    %62 = vector.broadcast %cst_32 : f32 to vector<128x128xf32>
    %63 = arith.maximumf %61, %62 : vector<128x128xf32>
    %64 = arith.truncf %63 : vector<128x128xf32> to vector<128x128xbf16>
    %c0_33 = arith.constant 0 : index
    %c0_34 = arith.constant 0 : index
    %65 = vector.load %arg9[%c0_33, %c0_34] : memref<128x128xbf16, #tpu.memory_space<vmem>>, vector<128x128xbf16>
    %cst_35 = arith.constant dense<0.000000e+00> : vector<128x128xf32>
    %66 = tpu.matmul %64, %65, %cst_35 {dimension_numbers = #tpu.dot_dimension_numbers<[1], [0], [0], [1], [0, 0, 1, 1], [], []>} : vector<128x128xbf16>, vector<128x128xbf16>, vector<128x128xf32> -> vector<128x128xf32>
    %c0_36 = arith.constant 0 : index
    %c0_37 = arith.constant 0 : index
    %67 = vector.load %arg10[%c0_36, %c0_37] : memref<1x128xf32, #tpu.memory_space<vmem>>, vector<1x128xf32>
    %68 = vector.broadcast %67 : vector<1x128xf32> to vector<128x128xf32>
    %69 = arith.addf %66, %68 : vector<128x128xf32>
    %70 = arith.negf %69 : vector<128x128xf32>
    %71 = math.exp %70 : vector<128x128xf32>
    %cst_38 = arith.constant 1.000000e+00 : f32
    %72 = vector.broadcast %cst_38 : f32 to vector<128x128xf32>
    %73 = arith.addf %72, %71 : vector<128x128xf32>
    %74 = arith.divf %72, %73 : vector<128x128xf32>
    %c0_39 = arith.constant 0 : index
    %c0_40 = arith.constant 0 : index
    %75 = vector.load %arg11[%c0_39, %c0_40] : memref<128x128xf32, #tpu.memory_space<vmem>>, vector<128x128xf32>
    tpu.vector_store %arg11[%c0_39, %c0_40], %74 {strides = array<i32>} : memref<128x128xf32, #tpu.memory_space<vmem>>, vector<128x128xf32>,
    return
  }
}

</mosaic_0001>

<llo_original>
// kernel: deepddi_forward.1
$region0: #{deepddi_forward.1}
  #allocation0 [shape = 'u32[]', space=smem, size = 0x4, offset = 0x4, fixed_abs, tag = 'smem constant byte address 0x4 - core index']
  #allocation1 [shape = 'u32[144,128]{1,0:T(1,128)}', space=vmem, size = 0x12000, scoped, tag = 'internal scratch']
  %s0 = inlined_call_operand.vmem [shape: bf16[128,128], index: 0, kind: input, shape index: {}]
  %s1 = inlined_call_operand.vmem [shape: bf16[128,128], index: 1, kind: input, shape index: {}]
  %s2 = inlined_call_operand.vmem [shape: bf16[128,256], index: 2, kind: input, shape index: {}]
  %s3 = inlined_call_operand.vmem [shape: bf16[128,256], index: 3, kind: input, shape index: {}]
  %s4 = inlined_call_operand.vmem [shape: f32[1,256], index: 4, kind: input, shape index: {}]
  %s5 = inlined_call_operand.vmem [shape: f32[1,256], index: 5, kind: input, shape index: {}]
  %s6 = inlined_call_operand.vmem [shape: bf16[256,128], index: 6, kind: input, shape index: {}]
  %s7 = inlined_call_operand.vmem [shape: f32[1,128], index: 7, kind: input, shape index: {}]
  %s8 = inlined_call_operand.vmem [shape: f32[1,128], index: 8, kind: input, shape index: {}]
  %s9 = inlined_call_operand.vmem [shape: bf16[128,128], index: 9, kind: input, shape index: {}]
  %s10 = inlined_call_operand.vmem [shape: f32[1,128], index: 10, kind: input, shape index: {}]
  %s11 = inlined_call_operand.vmem [shape: f32[128,128], index: 11, kind: output, shape index: {}]
  %s12 = sld [smem:[#allocation0]]
  $region54: #{deepddi_forward.1} parent=0
    _
  %s14 = ssub.s32 1, %s12
  %s15 = scalar_select 0, %s14, %s12
  // Predicated region
  $region2: #{deepddi_forward.1} parent=0 // pred_check
    _
  $region3: #{deepddi_forward.1} parent=0 // pred_check_branch
    %17 = sbr.rel (0) target = $region5
  $region4: #{deepddi_forward.1} parent=0 // pred_region
    _
  $region5: #{deepddi_forward.1} parent=0 // pred_fallthru
    _
  // Predicated region
  $region6: #{deepddi_forward.1} parent=0 // pred_check
    _
  $region7: #{deepddi_forward.1} parent=0 // pred_check_branch
    %19 = sbr.rel (0) target = $region9
  $region8: #{deepddi_forward.1} parent=0 // pred_region
    _
  $region9: #{deepddi_forward.1} parent=0 // pred_fallthru
    _
  // Predicated region
  $region10: #{deepddi_forward.1} parent=0 // pred_check
    _
  $region11: #{deepddi_forward.1} parent=0 // pred_check_branch
    %21 = sbr.rel (0) target = $region13
  $region12: #{deepddi_forward.1} parent=0 // pred_region
    _
  $region13: #{deepddi_forward.1} parent=0 // pred_fallthru
    _
  // Predicated region
  $region14: #{deepddi_forward.1} parent=0 // pred_check
    _
  $region15: #{deepddi_forward.1} parent=0 // pred_check_branch
    %23 = sbr.rel (0) target = $region17
  $region16: #{deepddi_forward.1} parent=0 // pred_region
    _
  $region17: #{deepddi_forward.1} parent=0 // pred_fallthru
    _
  // Predicated region
  $region18: #{deepddi_forward.1} parent=0 // pred_check
    _
  $region19: #{deepddi_forward.1} parent=0 // pred_check_branch
    %25 = sbr.rel (0) target = $region21
  $region20: #{deepddi_forward.1} parent=0 // pred_region
    _
  $region21: #{deepddi_forward.1} parent=0 // pred_fallthru
    _
  // Predicated region
  $region22: #{deepddi_forward.1} parent=0 // pred_check
    _
  $region23: #{deepddi_forward.1} parent=0 // pred_check_branch
    %27 = sbr.rel (0) target = $region25
  $region24: #{deepddi_forward.1} parent=0 // pred_region
    _
  $region25: #{deepddi_forward.1} parent=0 // pred_fallthru
    _
  // Predicated region
  $region26: #{deepddi_forward.1} parent=0 // pred_check
    _
  $region27: #{deepddi_forward.1} parent=0 // pred_check_branch
    %29 = sbr.rel (0) target = $region29
  $region28: #{deepddi_forward.1} parent=0 // pred_region
    _
  $region29: #{deepddi_forward.1} parent=0 // pred_fallthru
    _
  // Predicated region
  $region30: #{deepddi_forward.1} parent=0 // pred_check
    _
  $region31: #{deepddi_forward.1} parent=0 // pred_check_branch
    %31 = sbr.rel (0) target = $region33
  $region32: #{deepddi_forward.1} parent=0 // pred_region
    _
  $region33: #{deepddi_forward.1} parent=0 // pred_fallthru
    _
  // Predicated region
  $region34: #{deepddi_forward.1} parent=0 // pred_check
    _
  $region35: #{deepddi_forward.1} parent=0 // pred_check_branch
    %33 = sbr.rel (0) target = $region37
  $region36: #{deepddi_forward.1} parent=0 // pred_region
    _
  $region37: #{deepddi_forward.1} parent=0 // pred_fallthru
    _
  // Predicated region
  $region38: #{deepddi_forward.1} parent=0 // pred_check
    _
  $region39: #{deepddi_forward.1} parent=0 // pred_check_branch
    %35 = sbr.rel (0) target = $region41
  $region40: #{deepddi_forward.1} parent=0 // pred_region
    _
  $region41: #{deepddi_forward.1} parent=0 // pred_fallthru
    _
  // Predicated region
  $region42: #{deepddi_forward.1} parent=0 // pred_check
    _
  $region43: #{deepddi_forward.1} parent=0 // pred_check_branch
    %37 = sbr.rel (0) target = $region45
  $region44: #{deepddi_forward.1} parent=0 // pred_region
    _
  $region45: #{deepddi_forward.1} parent=0 // pred_fallthru
    _
  %v39 = vld [vmem:[%s0] sm:$0xf]
  %v40 = vld [vmem:[%s0 + $0x4] sm:$0xf]
  %v41 = vld [vmem:[%s0 + $0x8] sm:$0xf]
  %v42 = vld [vmem:[%s0 + $0xc] sm:$0xf]
  %v43 = vld [vmem:[%s0 + $0x10] sm:$0xf]
  %v44 = vld [vmem:[%s0 + $0x14] sm:$0xf]
  %v45 = vld [vmem:[%s0 + $0x18] sm:$0xf]
  %v46 = vld [vmem:[%s0 + $0x1c] sm:$0xf]
  %v47 = vld [vmem:[%s0 + $0x20] sm:$0xf]
  %v48 = vld [vmem:[%s0 + $0x24] sm:$0xf]
  %v49 = vld [vmem:[%s0 + $0x28] sm:$0xf]
  %v50 = vld [vmem:[%s0 + $0x2c] sm:$0xf]
  %v51 = vld [vmem:[%s0 + $0x30] sm:$0xf]
  %v52 = vld [vmem:[%s0 + $0x34] sm:$0xf]
  %v53 = vld [vmem:[%s0 + $0x38] sm:$0xf]
  %v54 = vld [vmem:[%s0 + $0x3c] sm:$0xf]
  %v55 = vld [vmem:[%s2] sm:$0xff]
  %v56 = vld [vmem:[%s2 + $0x8] sm:$0xff]
  %v57 = vld [vmem:[%s2 + $0x10] sm:$0xff]
  %v58 = vld [vmem:[%s2 + $0x18] sm:$0xff]
  %v59 = vld [vmem:[%s2 + $0x20] sm:$0xff]
  %v60 = vld [vmem:[%s2 + $0x28] sm:$0xff]
  %v61 = vld [vmem:[%s2 + $0x30] sm:$0xff]
  %v62 = vld [vmem:[%s2 + $0x38] sm:$0xff]
  %v63 = vld [vmem:[%s2 + $0x40] sm:$0xff]
  %v64 = vld [vmem:[%s2 + $0x48] sm:$0xff]
  %v65 = vld [vmem:[%s2 + $0x50] sm:$0xff]
  %v66 = vld [vmem:[%s2 + $0x58] sm:$0xff]
  %v67 = vld [vmem:[%s2 + $0x60] sm:$0xff]
  %v68 = vld [vmem:[%s2 + $0x68] sm:$0xff]
  %v69 = vld [vmem:[%s2 + $0x70] sm:$0xff]
  %v70 = vld [vmem:[%s2 + $0x78] sm:$0xff]
  %v71 = vld [vmem:[%s1] sm:$0xf]
  %v72 = vld [vmem:[%s1 + $0x4] sm:$0xf]
  %v73 = vld [vmem:[%s1 + $0x8] sm:$0xf]
  %v74 = vld [vmem:[%s1 + $0xc] sm:$0xf]
  %v75 = vld [vmem:[%s1 + $0x10] sm:$0xf]
  %v76 = vld [vmem:[%s1 + $0x14] sm:$0xf]
  %v77 = vld [vmem:[%s1 + $0x18] sm:$0xf]
  %v78 = vld [vmem:[%s1 + $0x1c] sm:$0xf]
  %v79 = vld [vmem:[%s1 + $0x20] sm:$0xf]
  %v80 = vld [vmem:[%s1 + $0x24] sm:$0xf]
  %v81 = vld [vmem:[%s1 + $0x28] sm:$0xf]
  %v82 = vld [vmem:[%s1 + $0x2c] sm:$0xf]
  %v83 = vld [vmem:[%s1 + $0x30] sm:$0xf]
  %v84 = vld [vmem:[%s1 + $0x34] sm:$0xf]
  %v85 = vld [vmem:[%s1 + $0x38] sm:$0xf]
  %v86 = vld [vmem:[%s1 + $0x3c] sm:$0xf]
  %v87 = vld [vmem:[%s3] sm:$0xff]
  %v88 = vld [vmem:[%s3 + $0x8] sm:$0xff]
  %v89 = vld [vmem:[%s3 + $0x10] sm:$0xff]
  %v90 = vld [vmem:[%s3 + $0x18] sm:$0xff]
  %v91 = vld [vmem:[%s3 + $0x20] sm:$0xff]
  %v92 = vld [vmem:[%s3 + $0x28] sm:$0xff]
  %v93 = vld [vmem:[%s3 + $0x30] sm:$0xff]
  %v94 = vld [vmem:[%s3 + $0x38] sm:$0xff]
  %v95 = vld [vmem:[%s3 + $0x40] sm:$0xff]
  %v96 = vld [vmem:[%s3 + $0x48] sm:$0xff]
  %v97 = vld [vmem:[%s3 + $0x50] sm:$0xff]
  %v98 = vld [vmem:[%s3 + $0x58] sm:$0xff]
  %v99 = vld [vmem:[%s3 + $0x60] sm:$0xff]
  %v100 = vld [vmem:[%s3 + $0x68] sm:$0xff]
  %v101 = vld [vmem:[%s3 + $0x70] sm:$0xff]
  %v102 = vld [vmem:[%s3 + $0x78] sm:$0xff]
  %v119 = vunpack.c.l.b16 %v71
  %v120 = vunpack.c.l.b16 %v72
  %v121 = vunpack.c.l.b16 %v73
  %v122 = vunpack.c.l.b16 %v74
  %v123 = vunpack.c.l.b16 %v75
  %v124 = vunpack.c.l.b16 %v76
  %v125 = vunpack.c.l.b16 %v77
  %v126 = vunpack.c.l.b16 %v78
  %v127 = vunpack.c.l.b16 %v79
  %v128 = vunpack.c.l.b16 %v80
  %v129 = vunpack.c.l.b16 %v81
  %v130 = vunpack.c.l.b16 %v82
  %v131 = vunpack.c.l.b16 %v83
  %v132 = vunpack.c.l.b16 %v84
  %v133 = vunpack.c.l.b16 %v85
  %v134 = vunpack.c.l.b16 %v86
  %v135 = vpack.c.b16 %v120, %v119
  %v136 = vpack.c.b16 %v122, %v121
  %v137 = vpack.c.b16 %v124, %v123
  %v138 = vpack.c.b16 %v126, %v125
  %v139 = vpack.c.b16 %v128, %v127
  %v140 = vpack.c.b16 %v130, %v129
  %v141 = vpack.c.b16 %v132, %v131
  %v142 = vpack.c.b16 %v134, %v133
  %v167 = vunpack.c.l.b16 %v87
  %v168 = vunpack.c.h.b16 %v87
  %v169 = vunpack.c.l.b16 %v88
  %v170 = vunpack.c.h.b16 %v88
  %v171 = vunpack.c.l.b16 %v89
  %v172 = vunpack.c.h.b16 %v89
  %v173 = vunpack.c.l.b16 %v90
  %v174 = vunpack.c.h.b16 %v90
  %v175 = vunpack.c.l.b16 %v91
  %v176 = vunpack.c.h.b16 %v91
  %v177 = vunpack.c.l.b16 %v92
  %v178 = vunpack.c.h.b16 %v92
  %v179 = vunpack.c.l.b16 %v93
  %v180 = vunpack.c.h.b16 %v93
  %v181 = vunpack.c.l.b16 %v94
  %v182 = vunpack.c.h.b16 %v94
  %v183 = vunpack.c.l.b16 %v95
  %v184 = vunpack.c.h.b16 %v95
  %v185 = vunpack.c.l.b16 %v96
  %v186 = vunpack.c.h.b16 %v96
  %v187 = vunpack.c.l.b16 %v97
  %v188 = vunpack.c.h.b16 %v97
  %v189 = vunpack.c.l.b16 %v98
  %v190 = vunpack.c.h.b16 %v98
  %v191 = vunpack.c.l.b16 %v99
  %v192 = vunpack.c.h.b16 %v99
  %v193 = vunpack.c.l.b16 %v100
  %v194 = vunpack.c.h.b16 %v100
  %v195 = vunpack.c.l.b16 %v101
  %v196 = vunpack.c.h.b16 %v101
  %v197 = vunpack.c.l.b16 %v102
  %v198 = vunpack.c.h.b16 %v102
  %v199 = vpack.c.b16 %v169, %v167
  %v200 = vpack.c.b16 %v170, %v168
  %v201 = vpack.c.b16 %v173, %v171
  %v202 = vpack.c.b16 %v174, %v172
  %v203 = vpack.c.b16 %v177, %v175
  %v204 = vpack.c.b16 %v178, %v176
  %v205 = vpack.c.b16 %v181, %v179
  %v206 = vpack.c.b16 %v182, %v180
  %v207 = vpack.c.b16 %v185, %v183
  %v208 = vpack.c.b16 %v186, %v184
  %v209 = vpack.c.b16 %v189, %v187
  %v210 = vpack.c.b16 %v190, %v188
  %v211 = vpack.c.b16 %v193, %v191
  %v212 = vpack.c.b16 %v194, %v192
  %v213 = vpack.c.b16 %v197, %v195
  %v214 = vpack.c.b16 %v198, %v196
  %231 = vmatprep.subr.bf16.mxu0 %v200
  %232 = vmatpush1.bf16.msra.mxu0 %v199
  %233 = vmatprep.subr.bf16.mxu0 %v202
  %234 = vmatpush1.bf16.msra.mxu0 %v201
  %235 = vmatprep.subr.bf16.mxu0 %v204
  %236 = vmatpush1.bf16.msra.mxu0 %v203
  %237 = vmatprep.subr.bf16.mxu0 %v206
  %238 = vmatpush1.bf16.msra.mxu0 %v205
  %239 = vmatprep.subr.bf16.mxu0 %v208
  %240 = vmatpush1.bf16.msra.mxu0 %v207
  %241 = vmatprep.subr.bf16.mxu0 %v210
  %242 = vmatpush1.bf16.msra.mxu0 %v209
  %243 = vmatprep.subr.bf16.mxu0 %v212
  %244 = vmatpush1.bf16.msra.mxu0 %v211
  %245 = vmatprep.subr.bf16.mxu0 %v214
  %246 = vmatpush1.bf16.msra.mxu0 %v213
  %247 = vmatprep.subr.bf16.mxu0 0
  %248 = vmatpush1.bf16.msra.mxu0 0
  %249 = vmatprep.subr.bf16.mxu0 0
  %250 = vmatpush1.bf16.msra.mxu0 0
  %251 = vmatprep.subr.bf16.mxu0 0
  %252 = vmatpush1.bf16.msra.mxu0 0
  %253 = vmatprep.subr.bf16.mxu0 0
  %254 = vmatpush1.bf16.msra.mxu0 0
  %255 = vmatprep.subr.bf16.mxu0 0
  %256 = vmatpush1.bf16.msra.mxu0 0
  %257 = vmatprep.subr.bf16.mxu0 0
  %258 = vmatpush1.bf16.msra.mxu0 0
  %259 = vmatprep.subr.bf16.mxu0 0
  %260 = vmatpush1.bf16.msra.mxu0 0
  %261 = vmatprep.subr.bf16.mxu0 0
  %262 = vmatpush1.bf16.msra.mxu0 0
  %263 = vmatprep.mubr.bf16.mxu0 0
  %264 = vmatmul.mubr.bf16.gmra.mrb[0].mxu0 %v135
  %v265 = vpop.f32.mrb[0].mxu0
  %v266 = vadd.f32 0.0, %v265
  %v267 = vpop.f32.mrb[0].mxu0
  %v268 = vadd.f32 0.0, %v267
  %v269 = vpop.f32.mrb[0].mxu0
  %v270 = vadd.f32 0.0, %v269
  %v271 = vpop.f32.mrb[0].mxu0
  %v272 = vadd.f32 0.0, %v271
  %273 = vmatprep.mubr.bf16.mxu0 0
  %274 = vmatmul.mubr.bf16.gmra.mrb[0].mxu0 %v136
  %v275 = vpop.f32.mrb[0].mxu0
  %v276 = vadd.f32 0.0, %v275
  %v277 = vpop.f32.mrb[0].mxu0
  %v278 = vadd.f32 0.0, %v277
  %v279 = vpop.f32.mrb[0].mxu0
  %v280 = vadd.f32 0.0, %v279
  %v281 = vpop.f32.mrb[0].mxu0
  %v282 = vadd.f32 0.0, %v281
  %283 = vmatprep.mubr.bf16.mxu0 0
  %284 = vmatmul.mubr.bf16.gmra.mrb[0].mxu0 %v137
  %v285 = vpop.f32.mrb[0].mxu0
  %v286 = vadd.f32 0.0, %v285
  %v287 = vpop.f32.mrb[0].mxu0
  %v288 = vadd.f32 0.0, %v287
  %v289 = vpop.f32.mrb[0].mxu0
  %v290 = vadd.f32 0.0, %v289
  %v291 = vpop.f32.mrb[0].mxu0
  %v292 = vadd.f32 0.0, %v291
  %293 = vmatprep.mubr.bf16.mxu0 0
  %294 = vmatmul.mubr.bf16.gmra.mrb[0].mxu0 %v138
  %v295 = vpop.f32.mrb[0].mxu0
  %v296 = vadd.f32 0.0, %v295
  %v297 = vpop.f32.mrb[0].mxu0
  %v298 = vadd.f32 0.0, %v297
  %v299 = vpop.f32.mrb[0].mxu0
  %v300 = vadd.f32 0.0, %v299
  %v301 = vpop.f32.mrb[0].mxu0
  %v302 = vadd.f32 0.0, %v301
  %303 = vmatprep.mubr.bf16.mxu0 0
  %304 = vmatmul.mubr.bf16.gmra.mrb[0].mxu0 %v139
  %v305 = vpop.f32.mrb[0].mxu0
  %v306 = vadd.f32 0.0, %v305
  %v307 = vpop.f32.mrb[0].mxu0
  %v308 = vadd.f32 0.0, %v307
  %v309 = vpop.f32.mrb[0].mxu0
  %v310 = vadd.f32 0.0, %v309
  %v311 = vpop.f32.mrb[0].mxu0
  %v312 = vadd.f32 0.0, %v311
  %313 = vmatprep.mubr.bf16.mxu0 0
  %314 = vmatmul.mubr.bf16.gmra.mrb[0].mxu0 %v140
  %v315 = vpop.f32.mrb[0].mxu0
  %v316 = vadd.f32 0.0, %v315
  %v317 = vpop.f32.mrb[0].mxu0
  %v318 = vadd.f32 0.0, %v317
  %v319 = vpop.f32.mrb[0].mxu0
  %v320 = vadd.f32 0.0, %v319
  %v321 = vpop.f32.mrb[0].mxu0
  %v322 = vadd.f32 0.0, %v321
  %323 = vmatprep.mubr.bf16.mxu0 0
  %324 = vmatmul.mubr.bf16.gmra.mrb[0].mxu0 %v141
  %v325 = vpop.f32.mrb[0].mxu0
  %v326 = vadd.f32 0.0, %v325
  %v327 = vpop.f32.mrb[0].mxu0
  %v328 = vadd.f32 0.0, %v327
  %v329 = vpop.f32.mrb[0].mxu0
  %v330 = vadd.f32 0.0, %v329
  %v331 = vpop.f32.mrb[0].mxu0
  %v332 = vadd.f32 0.0, %v331
  %333 = vmatprep.mubr.bf16.mxu0 0
  %334 = vmatmul.mubr.bf16.gmra.mrb[0].mxu0 %v142
  %v335 = vpop.f32.mrb[0].mxu0
  %v336 = vadd.f32 0.0, %v335
  %v337 = vpop.f32.mrb[0].mxu0
  %v338 = vadd.f32 0.0, %v337
  %v339 = vpop.f32.mrb[0].mxu0
  %v340 = vadd.f32 0.0, %v339
  %v341 = vpop.f32.mrb[0].mxu0
  %v342 = vadd.f32 0.0, %v341
  %343 = vdwg.mxu0
  %v360 = vunpack.c.l.b16 %v39
  %v361 = vunpack.c.l.b16 %v40
  %v362 = vunpack.c.l.b16 %v41
  %v363 = vunpack.c.l.b16 %v42
  %v364 = vunpack.c.l.b16 %v43
  %v365 = vunpack.c.l.b16 %v44
  %v366 = vunpack.c.l.b16 %v45
  %v367 = vunpack.c.l.b16 %v46
  %v368 = vunpack.c.l.b16 %v47
  %v369 = vunpack.c.l.b16 %v48
  %v370 = vunpack.c.l.b16 %v49
  %v371 = vunpack.c.l.b16 %v50
  %v372 = vunpack.c.l.b16 %v51
  %v373 = vunpack.c.l.b16 %v52
  %v374 = vunpack.c.l.b16 %v53
  %v375 = vunpack.c.l.b16 %v54
  %v376 = vpack.c.b16 %v361, %v360
  %v377 = vpack.c.b16 %v363, %v362
  %v378 = vpack.c.b16 %v365, %v364
  %v379 = vpack.c.b16 %v367, %v366
  %v380 = vpack.c.b16 %v369, %v368
  %v381 = vpack.c.b16 %v371, %v370
  %v382 = vpack.c.b16 %v373, %v372
  %v383 = vpack.c.b16 %v375, %v374
  %v408 = vunpack.c.l.b16 %v55
  %v409 = vunpack.c.h.b16 %v55
  %v410 = vunpack.c.l.b16 %v56
  %v411 = vunpack.c.h.b16 %v56
  %v412 = vunpack.c.l.b16 %v57
  %v413 = vunpack.c.h.b16 %v57
  %v414 = vunpack.c.l.b16 %v58
  %v415 = vunpack.c.h.b16 %v58
  %v416 = vunpack.c.l.b16 %v59
  %v417 = vunpack.c.h.b16 %v59
  %v418 = vunpack.c.l.b16 %v60
  %v419 = vunpack.c.h.b16 %v60
  %v420 = vunpack.c.l.b16 %v61
  %v421 = vunpack.c.h.b16 %v61
  %v422 = vunpack.c.l.b16 %v62
  %v423 = vunpack.c.h.b16 %v62
  %v424 = vunpack.c.l.b16 %v63
  %v425 = vunpack.c.h.b16 %v63
  %v426 = vunpack.c.l.b16 %v64
  %v427 = vunpack.c.h.b16 %v64
  %v428 = vunpack.c.l.b16 %v65
  %v429 = vunpack.c.h.b16 %v65
  %v430 = vunpack.c.l.b16 %v66
  %v431 = vunpack.c.h.b16 %v66
  %v432 = vunpack.c.l.b16 %v67
  %v433 = vunpack.c.h.b16 %v67
  %v434 = vunpack.c.l.b16 %v68
  %v435 = vunpack.c.h.b16 %v68
  %v436 = vunpack.c.l.b16 %v69
  %v437 = vunpack.c.h.b16 %v69
  %v438 = vunpack.c.l.b16 %v70
  %v439 = vunpack.c.h.b16 %v70
  %v440 = vpack.c.b16 %v410, %v408
  %v441 = vpack.c.b16 %v411, %v409
  %v442 = vpack.c.b16 %v414, %v412
  %v443 = vpack.c.b16 %v415, %v413
  %v444 = vpack.c.b16 %v418, %v416
  %v445 = vpack.c.b16 %v419, %v417
  %v446 = vpack.c.b16 %v422, %v420
  %v447 = vpack.c.b16 %v423, %v421
  %v448 = vpack.c.b16 %v426, %v424
  %v449 = vpack.c.b16 %v427, %v425
  %v450 = vpack.c.b16 %v430, %v428
  %v451 = vpack.c.b16 %v431, %v429
  %v452 = vpack.c.b16 %v434, %v432
  %v453 = vpack.c.b16 %v435, %v433
  %v454 = vpack.c.b16 %v438, %v436
  %v455 = vpack.c.b16 %v439, %v437
  %472 = vmatprep.subr.bf16.mxu0 %v441
  %473 = vmatpush1.bf16.msra.mxu0 %v440
  %474 = vmatprep.subr.bf16.mxu0 %v443
  %475 = vmatpush1.bf16.msra.mxu0 %v442
  %476 = vmatprep.subr.bf16.mxu0 %v445
  %477 = vmatpush1.bf16.msra.mxu0 %v444
  %478 = vmatprep.subr.bf16.mxu0 %v447
  %479 = vmatpush1.bf16.msra.mxu0 %v446
  %480 = vmatprep.subr.bf16.mxu0 %v449
  %481 = vmatpush1.bf16.msra.mxu0 %v448
  %482 = vmatprep.subr.bf16.mxu0 %v451
  %483 = vmatpush1.bf16.msra.mxu0 %v450
  %484 = vmatprep.subr.bf16.mxu0 %v453
  %485 = vmatpush1.bf16.msra.mxu0 %v452
  %486 = vmatprep.subr.bf16.mxu0 %v455
  %487 = vmatpush1.bf16.msra.mxu0 %v454
  %488 = vmatprep.subr.bf16.mxu0 0
  %489 = vmatpush1.bf16.msra.mxu0 0
  %490 = vmatprep.subr.bf16.mxu0 0
  %491 = vmatpush1.bf16.msra.mxu0 0
  %492 = vmatprep.subr.bf16.mxu0 0
  %493 = vmatpush1.bf16.msra.mxu0 0
  %494 = vmatprep.subr.bf16.mxu0 0
  %495 = vmatpush1.bf16.msra.mxu0 0
  %496 = vmatprep.subr.bf16.mxu0 0
  %497 = vmatpush1.bf16.msra.mxu0 0
  %498 = vmatprep.subr.bf16.mxu0 0
  %499 = vmatpush1.bf16.msra.mxu0 0
  %500 = vmatprep.subr.bf16.mxu0 0
  %501 = vmatpush1.bf16.msra.mxu0 0
  %502 = vmatprep.subr.bf16.mxu0 0
  %503 = vmatpush1.bf16.msra.mxu0 0
  %504 = vmatprep.mubr.bf16.mxu0 0
  %505 = vmatmul.mubr.bf16.gmra.mrb[0].mxu0 %v376
  %v506 = vpop.f32.mrb[0].mxu0
  %v507 = vadd.f32 %v266, %v506
  %v508 = vpop.f32.mrb[0].mxu0
  %v509 = vadd.f32 %v268, %v508
  %v510 = vpop.f32.mrb[0].mxu0
  %v511 = vadd.f32 %v270, %v510
  %v512 = vpop.f32.mrb[0].mxu0
  %v513 = vadd.f32 %v272, %v512
  %514 = vmatprep.mubr.bf16.mxu0 0
  %515 = vmatmul.mubr.bf16.gmra.mrb[0].mxu0 %v377
  %v516 = vpop.f32.mrb[0].mxu0
  %v517 = vadd.f32 %v276, %v516
  %v518 = vpop.f32.mrb[0].mxu0
  %v519 = vadd.f32 %v278, %v518
  %v520 = vpop.f32.mrb[0].mxu0
  %v521 = vadd.f32 %v280, %v520
  %v522 = vpop.f32.mrb[0].mxu0
  %v523 = vadd.f32 %v282, %v522
  %524 = vmatprep.mubr.bf16.mxu0 0
  %525 = vmatmul.mubr.bf16.gmra.mrb[0].mxu0 %v378
  %v526 = vpop.f32.mrb[0].mxu0
  %v527 = vadd.f32 %v286, %v526
  %v528 = vpop.f32.mrb[0].mxu0
  %v529 = vadd.f32 %v288, %v528
  %v530 = vpop.f32.mrb[0].mxu0
  %v531 = vadd.f32 %v290, %v530
  %v532 = vpop.f32.mrb[0].mxu0
  %v533 = vadd.f32 %v292, %v532
  %534 = vmatprep.mubr.bf16.mxu0 0
  %535 = vmatmul.mubr.bf16.gmra.mrb[0].mxu0 %v379
  %v536 = vpop.f32.mrb[0].mxu0
  %v537 = vadd.f32 %v296, %v536
  %v538 = vpop.f32.mrb[0].mxu0
  %v539 = vadd.f32 %v298, %v538
  %v540 = vpop.f32.mrb[0].mxu0
  %v541 = vadd.f32 %v300, %v540
  %v542 = vpop.f32.mrb[0].mxu0
  %v543 = vadd.f32 %v302, %v542
  %544 = vmatprep.mubr.bf16.mxu0 0
  %545 = vmatmul.mubr.bf16.gmra.mrb[0].mxu0 %v380
  %v546 = vpop.f32.mrb[0].mxu0
  %v547 = vadd.f32 %v306, %v546
  %v548 = vpop.f32.mrb[0].mxu0
  %v549 = vadd.f32 %v308, %v548
  %v550 = vpop.f32.mrb[0].mxu0
  %v551 = vadd.f32 %v310, %v550
  %v552 = vpop.f32.mrb[0].mxu0
  %v553 = vadd.f32 %v312, %v552
  %554 = vmatprep.mubr.bf16.mxu0 0
  %555 = vmatmul.mubr.bf16.gmra.mrb[0].mxu0 %v381
  %v556 = vpop.f32.mrb[0].mxu0
  %v557 = vadd.f32 %v316, %v556
  %v558 = vpop.f32.mrb[0].mxu0
  %v559 = vadd.f32 %v318, %v558
  %v560 = vpop.f32.mrb[0].mxu0
  %v561 = vadd.f32 %v320, %v560
  %v562 = vpop.f32.mrb[0].mxu0
  %v563 = vadd.f32 %v322, %v562
  %564 = vmatprep.mubr.bf16.mxu0 0
  %565 = vmatmul.mubr.bf16.gmra.mrb[0].mxu0 %v382
  %v566 = vpop.f32.mrb[0].mxu0
  %v567 = vadd.f32 %v326, %v566
  %v568 = vpop.f32.mrb[0].mxu0
  %v569 = vadd.f32 %v328, %v568
  %v570 = vpop.f32.mrb[0].mxu0
  %v571 = vadd.f32 %v330, %v570
  %v572 = vpop.f32.mrb[0].mxu0
  %v573 = vadd.f32 %v332, %v572
  %574 = vmatprep.mubr.bf16.mxu0 0
  %575 = vmatmul.mubr.bf16.gmra.mrb[0].mxu0 %v383
  %v576 = vpop.f32.mrb[0].mxu0
  %v577 = vadd.f32 %v336, %v576
  %v578 = vpop.f32.mrb[0].mxu0
  %v579 = vadd.f32 %v338, %v578
  %v580 = vpop.f32.mrb[0].mxu0
  %v581 = vadd.f32 %v340, %v580
  %v582 = vpop.f32.mrb[0].mxu0
  %v583 = vadd.f32 %v342, %v582
  %584 = vdwg.mxu0
  %v585 = vld [vmem:[%s4] sm:$0x3]
  %v586 = vld [vmem:[%s5] sm:$0x3]
  %v587 = vadd.f32 %v507, %v511
  %v588 = vadd.f32 %v587, %v517
  %v589 = vadd.f32 %v588, %v521
  %v590 = vadd.f32 %v589, %v527
  %v591 = vadd.f32 %v590, %v531
  %v592 = vadd.f32 %v591, %v537
  %v593 = vadd.f32 %v592, %v541
  %v594 = vadd.f32 %v593, %v547
  %v595 = vadd.f32 %v594, %v551
  %v596 = vadd.f32 %v595, %v557
  %v597 = vadd.f32 %v596, %v561
  %v598 = vadd.f32 %v597, %v567
  %v599 = vadd.f32 %v598, %v571
  %v600 = vadd.f32 %v599, %v577
  %v601 = vadd.f32 %v600, %v581
  %v602 = vrot.slane %v601, 4
  %v603 = vadd.f32 %v601, %v602
  %v604 = vrot.slane %v603, 2
  %v605 = vadd.f32 %v603, %v604
  %v606 = vrot.slane %v605, 1
  %v607 = vadd.f32 %v605, %v606
  %v608 = vadd.f32 %v509, %v513
  %v609 = vadd.f32 %v608, %v519
  %v610 = vadd.f32 %v609, %v523
  %v611 = vadd.f32 %v610, %v529
  %v612 = vadd.f32 %v611, %v533
  %v613 = vadd.f32 %v612, %v539
  %v614 = vadd.f32 %v613, %v543
  %v615 = vadd.f32 %v614, %v549
  %v616 = vadd.f32 %v615, %v553
  %v617 = vadd.f32 %v616, %v559
  %v618 = vadd.f32 %v617, %v563
  %v619 = vadd.f32 %v618, %v569
  %v620 = vadd.f32 %v619, %v573
  %v621 = vadd.f32 %v620, %v579
  %v622 = vadd.f32 %v621, %v583
  %v623 = vrot.slane %v622, 4
  %v624 = vadd.f32 %v622, %v623
  %v625 = vrot.slane %v624, 2
  %v626 = vadd.f32 %v624, %v625
  %v627 = vrot.slane %v626, 1
  %v628 = vadd.f32 %v626, %v627
  %v629 = vmul.f32 %v607, 0.0078125
  %v630 = vmul.f32 %v628, 0.0078125
  %v631 = vmul.f32 %v507, %v507
  %v632 = vmul.f32 %v509, %v509
  %v633 = vmul.f32 %v511, %v511
  %v634 = vmul.f32 %v513, %v513
  %v635 = vmul.f32 %v517, %v517
  %v636 = vmul.f32 %v519, %v519
  %v637 = vmul.f32 %v521, %v521
  %v638 = vmul.f32 %v523, %v523
  %v639 = vmul.f32 %v527, %v527
  %v640 = vmul.f32 %v529, %v529
  %v641 = vmul.f32 %v531, %v531
  %v642 = vmul.f32 %v533, %v533
  %v643 = vmul.f32 %v537, %v537
  %v644 = vmul.f32 %v539, %v539
  %v645 = vmul.f32 %v541, %v541
  %v646 = vmul.f32 %v543, %v543
  %v647 = vmul.f32 %v547, %v547
  %v648 = vmul.f32 %v549, %v549
  %v649 = vmul.f32 %v551, %v551
  %v650 = vmul.f32 %v553, %v553
  %v651 = vmul.f32 %v557, %v557
  %v652 = vmul.f32 %v559, %v559
  %v653 = vmul.f32 %v561, %v561
  %v654 = vmul.f32 %v563, %v563
  %v655 = vmul.f32 %v567, %v567
  %v656 = vmul.f32 %v569, %v569
  %v657 = vmul.f32 %v571, %v571
  %v658 = vmul.f32 %v573, %v573
  %v659 = vmul.f32 %v577, %v577
  %v660 = vmul.f32 %v579, %v579
  %v661 = vmul.f32 %v581, %v581
  %v662 = vmul.f32 %v583, %v583
  %v663 = vadd.f32 %v631, %v633
  %v664 = vadd.f32 %v663, %v635
  %v665 = vadd.f32 %v664, %v637
  %v666 = vadd.f32 %v665, %v639
  %v667 = vadd.f32 %v666, %v641
  %v668 = vadd.f32 %v667, %v643
  %v669 = vadd.f32 %v668, %v645
  %v670 = vadd.f32 %v669, %v647
  %v671 = vadd.f32 %v670, %v649
  %v672 = vadd.f32 %v671, %v651
  %v673 = vadd.f32 %v672, %v653
  %v674 = vadd.f32 %v673, %v655
  %v675 = vadd.f32 %v674, %v657
  %v676 = vadd.f32 %v675, %v659
  %v677 = vadd.f32 %v676, %v661
  %v678 = vrot.slane %v677, 4
  %v679 = vadd.f32 %v677, %v678
  %v680 = vrot.slane %v679, 2
  %v681 = vadd.f32 %v679, %v680
  %v682 = vrot.slane %v681, 1
  %v683 = vadd.f32 %v681, %v682
  %v684 = vadd.f32 %v632, %v634
  %v685 = vadd.f32 %v684, %v636
  %v686 = vadd.f32 %v685, %v638
  %v687 = vadd.f32 %v686, %v640
  %v688 = vadd.f32 %v687, %v642
  %v689 = vadd.f32 %v688, %v644
  %v690 = vadd.f32 %v689, %v646
  %v691 = vadd.f32 %v690, %v648
  %v692 = vadd.f32 %v691, %v650
  %v693 = vadd.f32 %v692, %v652
  %v694 = vadd.f32 %v693, %v654
  %v695 = vadd.f32 %v694, %v656
  %v696 = vadd.f32 %v695, %v658
  %v697 = vadd.f32 %v696, %v660
  %v698 = vadd.f32 %v697, %v662
  %v699 = vrot.slane %v698, 4
  %v700 = vadd.f32 %v698, %v699
  %v701 = vrot.slane %v700, 2
  %v702 = vadd.f32 %v700, %v701
  %v703 = vrot.slane %v702, 1
  %v704 = vadd.f32 %v702, %v703
  %v705 = vmul.f32 %v683, 0.0078125
  %v706 = vmul.f32 %v704, 0.0078125
  %v707 = vmul.f32 %v629, %v629
  %v708 = vmul.f32 %v630, %v630
  %v709 = vsub.f32 %v705, %v707
  %v710 = vsub.f32 %v706, %v708
  %v711 = vmax.f32 %v709, 0.0
  %v712 = vmax.f32 %v710, 0.0
  %v713 = vadd.f32 %v711, 1e-05
  %v714 = vadd.f32 %v712, 1e-05
  %v715 = vrsqrt.pop %v713
  %v716 = vrsqrt.pop %v714
  %v719 = vcombine.low %v715, %v716
  %v721 = vunpack.c.l.s4 1966171168
  %v722 = vunpack.c.0.s8 %v721
  %v723 = vlaneseq
  %v724 = vshrl.u32 %v723, 7
  %v725 = vsub.s32 %v722, %v724
  %v726 = vrot.slane %v719, %v725
  %v728 = vunpack.c.l.s4 1966171168
  %v729 = vunpack.c.0.s8 %v728
  %v730 = vlaneseq
  %v731 = vshrl.u32 %v730, 7
  %v732 = vsub.s32 %v729, %v731
  %v733 = vrot.slane %v726, %v732
  %v735 = vmul.f32 %v585, %v733
  %v737 = vlaneseq
  %v738 = vshrl.u32 %v737, 7
  %v739 = vsub.s32 0, %v738
  %v740 = vrot.slane %v735, %v739
  %v741 = vlaneseq
  %v742 = vshrl.u32 %v741, 7
  %v743 = vsub.s32 1, %v742
  %v744 = vrot.slane %v735, %v743
  %v747 = vmul.f32 %v629, %v740
  %v748 = vmul.f32 %v630, %v744
  %v751 = vcombine.low %v747, %v748
  %v753 = vunpack.c.l.s4 1966171168
  %v754 = vunpack.c.0.s8 %v753
  %v755 = vlaneseq
  %v756 = vshrl.u32 %v755, 7
  %v757 = vsub.s32 %v754, %v756
  %v758 = vrot.slane %v751, %v757
  %v760 = vunpack.c.l.s4 1966171168
  %v761 = vunpack.c.0.s8 %v760
  %v762 = vlaneseq
  %v763 = vshrl.u32 %v762, 7
  %v764 = vsub.s32 %v761, %v763
  %v765 = vrot.slane %v758, %v764
  %v767 = vsub.f32 %v586, %v765
  %v768 = vmul.f32 %v507, %v740
  %v769 = vmul.f32 %v509, %v744
  %v770 = vmul.f32 %v511, %v740
  %v771 = vmul.f32 %v513, %v744
  %v772 = vmul.f32 %v517, %v740
  %v773 = vmul.f32 %v519, %v744
  %v774 = vmul.f32 %v521, %v740
  %v775 = vmul.f32 %v523, %v744
  %v776 = vmul.f32 %v527, %v740
  %v777 = vmul.f32 %v529, %v744
  %v778 = vmul.f32 %v531, %v740
  %v779 = vmul.f32 %v533, %v744
  %v780 = vmul.f32 %v537, %v740
  %v781 = vmul.f32 %v539, %v744
  %v782 = vmul.f32 %v541, %v740
  %v783 = vmul.f32 %v543, %v744
  %v784 = vmul.f32 %v547, %v740
  %v785 = vmul.f32 %v549, %v744
  %v786 = vmul.f32 %v551, %v740
  %v787 = vmul.f32 %v553, %v744
  %v788 = vmul.f32 %v557, %v740
  %v789 = vmul.f32 %v559, %v744
  %v790 = vmul.f32 %v561, %v740
  %v791 = vmul.f32 %v563, %v744
  %v792 = vmul.f32 %v567, %v740
  %v793 = vmul.f32 %v569, %v744
  %v794 = vmul.f32 %v571, %v740
  %v795 = vmul.f32 %v573, %v744
  %v796 = vmul.f32 %v577, %v740
  %v797 = vmul.f32 %v579, %v744
  %v798 = vmul.f32 %v581, %v740
  %v799 = vmul.f32 %v583, %v744
  %v801 = vlaneseq
  %v802 = vshrl.u32 %v801, 7
  %v803 = vsub.s32 0, %v802
  %v804 = vrot.slane %v767, %v803
  %v805 = vlaneseq
  %v806 = vshrl.u32 %v805, 7
  %v807 = vsub.s32 1, %v806
  %v808 = vrot.slane %v767, %v807
  %v811 = vadd.f32 %v768, %v804
  %v812 = vadd.f32 %v769, %v808
  %v813 = vadd.f32 %v770, %v804
  %v814 = vadd.f32 %v771, %v808
  %v815 = vadd.f32 %v772, %v804
  %v816 = vadd.f32 %v773, %v808
  %v817 = vadd.f32 %v774, %v804
  %v818 = vadd.f32 %v775, %v808
  %v819 = vadd.f32 %v776, %v804
  %v820 = vadd.f32 %v777, %v808
  %v821 = vadd.f32 %v778, %v804
  %v822 = vadd.f32 %v779, %v808
  %v823 = vadd.f32 %v780, %v804
  %v824 = vadd.f32 %v781, %v808
  %v825 = vadd.f32 %v782, %v804
  %v826 = vadd.f32 %v783, %v808
  %v827 = vadd.f32 %v784, %v804
  %v828 = vadd.f32 %v785, %v808
  %v829 = vadd.f32 %v786, %v804
  %v830 = vadd.f32 %v787, %v808
  %v831 = vadd.f32 %v788, %v804
  %v832 = vadd.f32 %v789, %v808
  %v833 = vadd.f32 %v790, %v804
  %v834 = vadd.f32 %v791, %v808
  %v835 = vadd.f32 %v792, %v804
  %v836 = vadd.f32 %v793, %v808
  %v837 = vadd.f32 %v794, %v804
  %v838 = vadd.f32 %v795, %v808
  %v839 = vadd.f32 %v796, %v804
  %v840 = vadd.f32 %v797, %v808
  %v841 = vadd.f32 %v798, %v804
  %v842 = vadd.f32 %v799, %v808
  %v843 = vmax.f32 %v811, 0.0
  %v844 = vmax.f32 %v812, 0.0
  %v845 = vmax.f32 %v813, 0.0
  %v846 = vmax.f32 %v814, 0.0
  %v847 = vmax.f32 %v815, 0.0
  %v848 = vmax.f32 %v816, 0.0
  %v849 = vmax.f32 %v817, 0.0
  %v850 = vmax.f32 %v818, 0.0
  %v851 = vmax.f32 %v819, 0.0
  %v852 = vmax.f32 %v820, 0.0
  %v853 = vmax.f32 %v821, 0.0
  %v854 = vmax.f32 %v822, 0.0
  %v855 = vmax.f32 %v823, 0.0
  %v856 = vmax.f32 %v824, 0.0
  %v857 = vmax.f32 %v825, 0.0
  %v858 = vmax.f32 %v826, 0.0
  %v859 = vmax.f32 %v827, 0.0
  %v860 = vmax.f32 %v828, 0.0
  %v861 = vmax.f32 %v829, 0.0
  %v862 = vmax.f32 %v830, 0.0
  %v863 = vmax.f32 %v831, 0.0
  %v864 = vmax.f32 %v832, 0.0
  %v865 = vmax.f32 %v833, 0.0
  %v866 = vmax.f32 %v834, 0.0
  %v867 = vmax.f32 %v835, 0.0
  %v868 = vmax.f32 %v836, 0.0
  %v869 = vmax.f32 %v837, 0.0
  %v870 = vmax.f32 %v838, 0.0
  %v871 = vmax.f32 %v839, 0.0
  %v872 = vmax.f32 %v840, 0.0
  %v873 = vmax.f32 %v841, 0.0
  %v874 = vmax.f32 %v842, 0.0
  %v875 = vpack.c.bf16 %v845, %v843
  %v876 = vpack.c.bf16 %v846, %v844
  %v877 = vpack.c.bf16 %v849, %v847
  %v878 = vpack.c.bf16 %v850, %v848
  %v879 = vpack.c.bf16 %v853, %v851
  %v880 = vpack.c.bf16 %v854, %v852
  %v881 = vpack.c.bf16 %v857, %v855
  %v882 = vpack.c.bf16 %v858, %v856
  %v883 = vpack.c.bf16 %v861, %v859
  %v884 = vpack.c.bf16 %v862, %v860
  %v885 = vpack.c.bf16 %v865, %v863
  %v886 = vpack.c.bf16 %v866, %v864
  %v887 = vpack.c.bf16 %v869, %v867
  %v888 = vpack.c.bf16 %v870, %v868
  %v889 = vpack.c.bf16 %v873, %v871
  %v890 = vpack.c.bf16 %v874, %v872
  %v891 = vld [vmem:[%s6] sm:$0xf]
  %v892 = vld [vmem:[%s6 + $0x4] sm:$0xf]
  %v893 = vld [vmem:[%s6 + $0x8] sm:$0xf]
  %v894 = vld [vmem:[%s6 + $0xc] sm:$0xf]
  %v895 = vld [vmem:[%s6 + $0x10] sm:$0xf]
  %v896 = vld [vmem:[%s6 + $0x14] sm:$0xf]
  %v897 = vld [vmem:[%s6 + $0x18] sm:$0xf]
  %v898 = vld [vmem:[%s6 + $0x1c] sm:$0xf]
  %v899 = vld [vmem:[%s6 + $0x20] sm:$0xf]
  %v900 = vld [vmem:[%s6 + $0x24] sm:$0xf]
  %v901 = vld [vmem:[%s6 + $0x28] sm:$0xf]
  %v902 = vld [vmem:[%s6 + $0x2c] sm:$0xf]
  %v903 = vld [vmem:[%s6 + $0x30] sm:$0xf]
  %v904 = vld [vmem:[%s6 + $0x34] sm:$0xf]
  %v905 = vld [vmem:[%s6 + $0x38] sm:$0xf]
  %v906 = vld [vmem:[%s6 + $0x3c] sm:$0xf]
  %v907 = vld [vmem:[%s6 + $0x40] sm:$0xf]
  %v908 = vld [vmem:[%s6 + $0x44] sm:$0xf]
  %v909 = vld [vmem:[%s6 + $0x48] sm:$0xf]
  %v910 = vld [vmem:[%s6 + $0x4c] sm:$0xf]
  %v911 = vld [vmem:[%s6 + $0x50] sm:$0xf]
  %v912 = vld [vmem:[%s6 + $0x54] sm:$0xf]
  %v913 = vld [vmem:[%s6 + $0x58] sm:$0xf]
  %v914 = vld [vmem:[%s6 + $0x5c] sm:$0xf]
  %v915 = vld [vmem:[%s6 + $0x60] sm:$0xf]
  %v916 = vld [vmem:[%s6 + $0x64] sm:$0xf]
  %v917 = vld [vmem:[%s6 + $0x68] sm:$0xf]
  %v918 = vld [vmem:[%s6 + $0x6c] sm:$0xf]
  %v919 = vld [vmem:[%s6 + $0x70] sm:$0xf]
  %v920 = vld [vmem:[%s6 + $0x74] sm:$0xf]
  %v921 = vld [vmem:[%s6 + $0x78] sm:$0xf]
  %v922 = vld [vmem:[%s6 + $0x7c] sm:$0xf]
  %v955 = vunpack.c.l.b16 %v891
  %v956 = vunpack.c.l.b16 %v892
  %v957 = vunpack.c.l.b16 %v893
  %v958 = vunpack.c.l.b16 %v894
  %v959 = vunpack.c.l.b16 %v895
  %v960 = vunpack.c.l.b16 %v896
  %v961 = vunpack.c.l.b16 %v897
  %v962 = vunpack.c.l.b16 %v898
  %v963 = vunpack.c.l.b16 %v899
  %v964 = vunpack.c.l.b16 %v900
  %v965 = vunpack.c.l.b16 %v901
  %v966 = vunpack.c.l.b16 %v902
  %v967 = vunpack.c.l.b16 %v903
  %v968 = vunpack.c.l.b16 %v904
  %v969 = vunpack.c.l.b16 %v905
  %v970 = vunpack.c.l.b16 %v906
  %v971 = vunpack.c.l.b16 %v907
  %v972 = vunpack.c.l.b16 %v908
  %v973 = vunpack.c.l.b16 %v909
  %v974 = vunpack.c.l.b16 %v910
  %v975 = vunpack.c.l.b16 %v911
  %v976 = vunpack.c.l.b16 %v912
  %v977 = vunpack.c.l.b16 %v913
  %v978 = vunpack.c.l.b16 %v914
  %v979 = vunpack.c.l.b16 %v915
  %v980 = vunpack.c.l.b16 %v916
  %v981 = vunpack.c.l.b16 %v917
  %v982 = vunpack.c.l.b16 %v918
  %v983 = vunpack.c.l.b16 %v919
  %v984 = vunpack.c.l.b16 %v920
  %v985 = vunpack.c.l.b16 %v921
  %v986 = vunpack.c.l.b16 %v922
  %v987 = vpack.c.b16 %v956, %v955
  %v988 = vpack.c.b16 %v958, %v957
  %v989 = vpack.c.b16 %v960, %v959
  %v990 = vpack.c.b16 %v962, %v961
  %v991 = vpack.c.b16 %v964, %v963
  %v992 = vpack.c.b16 %v966, %v965
  %v993 = vpack.c.b16 %v968, %v967
  %v994 = vpack.c.b16 %v970, %v969
  %v995 = vpack.c.b16 %v972, %v971
  %v996 = vpack.c.b16 %v974, %v973
  %v997 = vpack.c.b16 %v976, %v975
  %v998 = vpack.c.b16 %v978, %v977
  %v999 = vpack.c.b16 %v980, %v979
  %v1000 = vpack.c.b16 %v982, %v981
  %v1001 = vpack.c.b16 %v984, %v983
  %v1002 = vpack.c.b16 %v986, %v985
  %1019 = vmatprep.subr.bf16.mxu0 0
  %1020 = vmatpush1.bf16.msra.mxu0 %v987
  %1021 = vmatprep.subr.bf16.mxu0 0
  %1022 = vmatpush1.bf16.msra.mxu0 %v988
  %1023 = vmatprep.subr.bf16.mxu0 0
  %1024 = vmatpush1.bf16.msra.mxu0 %v989
  %1025 = vmatprep.subr.bf16.mxu0 0
  %1026 = vmatpush1.bf16.msra.mxu0 %v990
  %1027 = vmatprep.subr.bf16.mxu0 0
  %1028 = vmatpush1.bf16.msra.mxu0 %v991
  %1029 = vmatprep.subr.bf16.mxu0 0
  %1030 = vmatpush1.bf16.msra.mxu0 %v992
  %1031 = vmatprep.subr.bf16.mxu0 0
  %1032 = vmatpush1.bf16.msra.mxu0 %v993
  %1033 = vmatprep.subr.bf16.mxu0 0
  %1034 = vmatpush1.bf16.msra.mxu0 %v994
  %1035 = vmatprep.subr.bf16.mxu0 0
  %1036 = vmatpush1.bf16.msra.mxu0 %v995
  %1037 = vmatprep.subr.bf16.mxu0 0
  %1038 = vmatpush1.bf16.msra.mxu0 %v996
  %1039 = vmatprep.subr.bf16.mxu0 0
  %1040 = vmatpush1.bf16.msra.mxu0 %v997
  %1041 = vmatprep.subr.bf16.mxu0 0
  %1042 = vmatpush1.bf16.msra.mxu0 %v998
  %1043 = vmatprep.subr.bf16.mxu0 0
  %1044 = vmatpush1.bf16.msra.mxu0 %v999
  %1045 = vmatprep.subr.bf16.mxu0 0
  %1046 = vmatpush1.bf16.msra.mxu0 %v1000
  %1047 = vmatprep.subr.bf16.mxu0 0
  %1048 = vmatpush1.bf16.msra.mxu0 %v1001
  %1049 = vmatprep.subr.bf16.mxu0 0
  %1050 = vmatpush1.bf16.msra.mxu0 %v1002
  %1051 = vmatprep.mubr.bf16.mxu0 %v876
  %1052 = vmatmul.mubr.bf16.gmra.mrb[0].mxu0 %v875
  %v1053 = vpop.f32.mrb[0].mxu0
  %v1054 = vadd.f32 0.0, %v1053
  %v1055 = vpop.f32.mrb[0].mxu0
  %v1056 = vpop.f32.mrb[0].mxu0
  %v1057 = vadd.f32 0.0, %v1056
  %v1058 = vpop.f32.mrb[0].mxu0
  %1059 = vmatprep.mubr.bf16.mxu0 %v878
  %1060 = vmatmul.mubr.bf16.gmra.mrb[0].mxu0 %v877
  %v1061 = vpop.f32.mrb[0].mxu0
  %v1062 = vadd.f32 0.0, %v1061
  %v1063 = vpop.f32.mrb[0].mxu0
  %v1064 = vpop.f32.mrb[0].mxu0
  %v1065 = vadd.f32 0.0, %v1064
  %v1066 = vpop.f32.mrb[0].mxu0
  %1067 = vmatprep.mubr.bf16.mxu0 %v880
  %1068 = vmatmul.mubr.bf16.gmra.mrb[0].mxu0 %v879
  %v1069 = vpop.f32.mrb[0].mxu0
  %v1070 = vadd.f32 0.0, %v1069
  %v1071 = vpop.f32.mrb[0].mxu0
  %v1072 = vpop.f32.mrb[0].mxu0
  %v1073 = vadd.f32 0.0, %v1072
  %v1074 = vpop.f32.mrb[0].mxu0
  %1075 = vmatprep.mubr.bf16.mxu0 %v882
  %1076 = vmatmul.mubr.bf16.gmra.mrb[0].mxu0 %v881
  %v1077 = vpop.f32.mrb[0].mxu0
  %v1078 = vadd.f32 0.0, %v1077
  %v1079 = vpop.f32.mrb[0].mxu0
  %v1080 = vpop.f32.mrb[0].mxu0
  %v1081 = vadd.f32 0.0, %v1080
  %v1082 = vpop.f32.mrb[0].mxu0
  %1083 = vmatprep.mubr.bf16.mxu0 %v884
  %1084 = vmatmul.mubr.bf16.gmra.mrb[0].mxu0 %v883
  %v1085 = vpop.f32.mrb[0].mxu0
  %v1086 = vadd.f32 0.0, %v1085
  %v1087 = vpop.f32.mrb[0].mxu0
  %v1088 = vpop.f32.mrb[0].mxu0
  %v1089 = vadd.f32 0.0, %v1088
  %v1090 = vpop.f32.mrb[0].mxu0
  %1091 = vmatprep.mubr.bf16.mxu0 %v886
  %1092 = vmatmul.mubr.bf16.gmra.mrb[0].mxu0 %v885
  %v1093 = vpop.f32.mrb[0].mxu0
  %v1094 = vadd.f32 0.0, %v1093
  %v1095 = vpop.f32.mrb[0].mxu0
  %v1096 = vpop.f32.mrb[0].mxu0
  %v1097 = vadd.f32 0.0, %v1096
  %v1098 = vpop.f32.mrb[0].mxu0
  %1099 = vmatprep.mubr.bf16.mxu0 %v888
  %1100 = vmatmul.mubr.bf16.gmra.mrb[0].mxu0 %v887
  %v1101 = vpop.f32.mrb[0].mxu0
  %v1102 = vadd.f32 0.0, %v1101
  %v1103 = vpop.f32.mrb[0].mxu0
  %v1104 = vpop.f32.mrb[0].mxu0
  %v1105 = vadd.f32 0.0, %v1104
  %v1106 = vpop.f32.mrb[0].mxu0
  %1107 = vmatprep.mubr.bf16.mxu0 %v890
  %1108 = vmatmul.mubr.bf16.gmra.mrb[0].mxu0 %v889
  %v1109 = vpop.f32.mrb[0].mxu0
  %v1110 = vadd.f32 0.0, %v1109
  %v1111 = vpop.f32.mrb[0].mxu0
  %v1112 = vpop.f32.mrb[0].mxu0
  %v1113 = vadd.f32 0.0, %v1112
  %v1114 = vpop.f32.mrb[0].mxu0
  %1115 = vdwg.mxu0
  %v1116 = vld [vmem:[%s7] sm:$0x1]
  %v1117 = vld [vmem:[%s8] sm:$0x1]
  %v1118 = vadd.f32 %v1054, %v1057
  %v1119 = vadd.f32 %v1118, %v1062
  %v1120 = vadd.f32 %v1119, %v1065
  %v1121 = vadd.f32 %v1120, %v1070
  %v1122 = vadd.f32 %v1121, %v1073
  %v1123 = vadd.f32 %v1122, %v1078
  %v1124 = vadd.f32 %v1123, %v1081
  %v1125 = vadd.f32 %v1124, %v1086
  %v1126 = vadd.f32 %v1125, %v1089
  %v1127 = vadd.f32 %v1126, %v1094
  %v1128 = vadd.f32 %v1127, %v1097
  %v1129 = vadd.f32 %v1128, %v1102
  %v1130 = vadd.f32 %v1129, %v1105
  %v1131 = vadd.f32 %v1130, %v1110
  %v1132 = vadd.f32 %v1131, %v1113
  %v1133 = vrot.slane %v1132, 4
  %v1134 = vadd.f32 %v1132, %v1133
  %v1135 = vrot.slane %v1134, 2
  %v1136 = vadd.f32 %v1134, %v1135
  %v1137 = vrot.slane %v1136, 1
  %v1138 = vadd.f32 %v1136, %v1137
  %v1139 = vmul.f32 %v1138, 0.0078125
  %v1140 = vmul.f32 %v1054, %v1054
  %v1141 = vmul.f32 %v1057, %v1057
  %v1142 = vmul.f32 %v1062, %v1062
  %v1143 = vmul.f32 %v1065, %v1065
  %v1144 = vmul.f32 %v1070, %v1070
  %v1145 = vmul.f32 %v1073, %v1073
  %v1146 = vmul.f32 %v1078, %v1078
  %v1147 = vmul.f32 %v1081, %v1081
  %v1148 = vmul.f32 %v1086, %v1086
  %v1149 = vmul.f32 %v1089, %v1089
  %v1150 = vmul.f32 %v1094, %v1094
  %v1151 = vmul.f32 %v1097, %v1097
  %v1152 = vmul.f32 %v1102, %v1102
  %v1153 = vmul.f32 %v1105, %v1105
  %v1154 = vmul.f32 %v1110, %v1110
  %v1155 = vmul.f32 %v1113, %v1113
  %v1156 = vadd.f32 %v1140, %v1141
  %v1157 = vadd.f32 %v1156, %v1142
  %v1158 = vadd.f32 %v1157, %v1143
  %v1159 = vadd.f32 %v1158, %v1144
  %v1160 = vadd.f32 %v1159, %v1145
  %v1161 = vadd.f32 %v1160, %v1146
  %v1162 = vadd.f32 %v1161, %v1147
  %v1163 = vadd.f32 %v1162, %v1148
  %v1164 = vadd.f32 %v1163, %v1149
  %v1165 = vadd.f32 %v1164, %v1150
  %v1166 = vadd.f32 %v1165, %v1151
  %v1167 = vadd.f32 %v1166, %v1152
  %v1168 = vadd.f32 %v1167, %v1153
  %v1169 = vadd.f32 %v1168, %v1154
  %v1170 = vadd.f32 %v1169, %v1155
  %v1171 = vrot.slane %v1170, 4
  %v1172 = vadd.f32 %v1170, %v1171
  %v1173 = vrot.slane %v1172, 2
  %v1174 = vadd.f32 %v1172, %v1173
  %v1175 = vrot.slane %v1174, 1
  %v1176 = vadd.f32 %v1174, %v1175
  %v1177 = vmul.f32 %v1176, 0.0078125
  %v1178 = vmul.f32 %v1139, %v1139
  %v1179 = vsub.f32 %v1177, %v1178
  %v1180 = vmax.f32 %v1179, 0.0
  %v1181 = vadd.f32 %v1180, 1e-05
  %v1182 = vrsqrt.pop %v1181
  %v1183 = vmul.f32 %v1116, %v1182
  %v1184 = vmul.f32 %v1139, %v1183
  %v1185 = vsub.f32 %v1117, %v1184
  %v1187 = vlaneseq
  %v1188 = vshrl.u32 %v1187, 7
  %v1189 = vsub.s32 0, %v1188
  %v1190 = vrot.slane %v1183, %v1189
  %v1192 = vmul.f32 %v1054, %v1190
  %v1193 = vmul.f32 %v1057, %v1190
  %v1194 = vmul.f32 %v1062, %v1190
  %v1195 = vmul.f32 %v1065, %v1190
  %v1196 = vmul.f32 %v1070, %v1190
  %v1197 = vmul.f32 %v1073, %v1190
  %v1198 = vmul.f32 %v1078, %v1190
  %v1199 = vmul.f32 %v1081, %v1190
  %v1200 = vmul.f32 %v1086, %v1190
  %v1201 = vmul.f32 %v1089, %v1190
  %v1202 = vmul.f32 %v1094, %v1190
  %v1203 = vmul.f32 %v1097, %v1190
  %v1204 = vmul.f32 %v1102, %v1190
  %v1205 = vmul.f32 %v1105, %v1190
  %v1206 = vmul.f32 %v1110, %v1190
  %v1207 = vmul.f32 %v1113, %v1190
  %v1209 = vlaneseq
  %v1210 = vshrl.u32 %v1209, 7
  %v1211 = vsub.s32 0, %v1210
  %v1212 = vrot.slane %v1185, %v1211
  %v1214 = vadd.f32 %v1192, %v1212
  %v1215 = vadd.f32 %v1193, %v1212
  %v1216 = vadd.f32 %v1194, %v1212
  %v1217 = vadd.f32 %v1195, %v1212
  %v1218 = vadd.f32 %v1196, %v1212
  %v1219 = vadd.f32 %v1197, %v1212
  %v1220 = vadd.f32 %v1198, %v1212
  %v1221 = vadd.f32 %v1199, %v1212
  %v1222 = vadd.f32 %v1200, %v1212
  %v1223 = vadd.f32 %v1201, %v1212
  %v1224 = vadd.f32 %v1202, %v1212
  %v1225 = vadd.f32 %v1203, %v1212
  %v1226 = vadd.f32 %v1204, %v1212
  %v1227 = vadd.f32 %v1205, %v1212
  %v1228 = vadd.f32 %v1206, %v1212
  %v1229 = vadd.f32 %v1207, %v1212
  %v1230 = vmax.f32 %v1214, 0.0
  %v1231 = vmax.f32 %v1215, 0.0
  %v1232 = vmax.f32 %v1216, 0.0
  %v1233 = vmax.f32 %v1217, 0.0
  %v1234 = vmax.f32 %v1218, 0.0
  %v1235 = vmax.f32 %v1219, 0.0
  %v1236 = vmax.f32 %v1220, 0.0
  %v1237 = vmax.f32 %v1221, 0.0
  %v1238 = vmax.f32 %v1222, 0.0
  %v1239 = vmax.f32 %v1223, 0.0
  %v1240 = vmax.f32 %v1224, 0.0
  %v1241 = vmax.f32 %v1225, 0.0
  %v1242 = vmax.f32 %v1226, 0.0
  %v1243 = vmax.f32 %v1227, 0.0
  %v1244 = vmax.f32 %v1228, 0.0
  %v1245 = vmax.f32 %v1229, 0.0
  %v1246 = vpack.c.bf16 %v1231, %v1230
  %v1247 = vpack.c.bf16 %v1233, %v1232
  %v1248 = vpack.c.bf16 %v1235, %v1234
  %v1249 = vpack.c.bf16 %v1237, %v1236
  %v1250 = vpack.c.bf16 %v1239, %v1238
  %v1251 = vpack.c.bf16 %v1241, %v1240
  %v1252 = vpack.c.bf16 %v1243, %v1242
  %v1253 = vpack.c.bf16 %v1245, %v1244
  %v1254 = vld [vmem:[%s9] sm:$0xf]
  %v1255 = vld [vmem:[%s9 + $0x4] sm:$0xf]
  %v1256 = vld [vmem:[%s9 + $0x8] sm:$0xf]
  %v1257 = vld [vmem:[%s9 + $0xc] sm:$0xf]
  %v1258 = vld [vmem:[%s9 + $0x10] sm:$0xf]
  %v1259 = vld [vmem:[%s9 + $0x14] sm:$0xf]
  %v1260 = vld [vmem:[%s9 + $0x18] sm:$0xf]
  %v1261 = vld [vmem:[%s9 + $0x1c] sm:$0xf]
  %v1262 = vld [vmem:[%s9 + $0x20] sm:$0xf]
  %v1263 = vld [vmem:[%s9 + $0x24] sm:$0xf]
  %v1264 = vld [vmem:[%s9 + $0x28] sm:$0xf]
  %v1265 = vld [vmem:[%s9 + $0x2c] sm:$0xf]
  %v1266 = vld [vmem:[%s9 + $0x30] sm:$0xf]
  %v1267 = vld [vmem:[%s9 + $0x34] sm:$0xf]
  %v1268 = vld [vmem:[%s9 + $0x38] sm:$0xf]
  %v1269 = vld [vmem:[%s9 + $0x3c] sm:$0xf]
  %v1270 = vld [vmem:[%s10] sm:$0x1]
  %v1272 = vlaneseq
  %v1273 = vshrl.u32 %v1272, 7
  %v1274 = vsub.s32 0, %v1273
  %v1275 = vrot.slane %v1270, %v1274
  %v1293 = vunpack.c.l.b16 %v1254
  %v1294 = vunpack.c.l.b16 %v1255
  %v1295 = vunpack.c.l.b16 %v1256
  %v1296 = vunpack.c.l.b16 %v1257
  %v1297 = vunpack.c.l.b16 %v1258
  %v1298 = vunpack.c.l.b16 %v1259
  %v1299 = vunpack.c.l.b16 %v1260
  %v1300 = vunpack.c.l.b16 %v1261
  %v1301 = vunpack.c.l.b16 %v1262
  %v1302 = vunpack.c.l.b16 %v1263
  %v1303 = vunpack.c.l.b16 %v1264
  %v1304 = vunpack.c.l.b16 %v1265
  %v1305 = vunpack.c.l.b16 %v1266
  %v1306 = vunpack.c.l.b16 %v1267
  %v1307 = vunpack.c.l.b16 %v1268
  %v1308 = vunpack.c.l.b16 %v1269
  %v1309 = vpack.c.b16 %v1294, %v1293
  %v1310 = vpack.c.b16 %v1296, %v1295
  %v1311 = vpack.c.b16 %v1298, %v1297
  %v1312 = vpack.c.b16 %v1300, %v1299
  %v1313 = vpack.c.b16 %v1302, %v1301
  %v1314 = vpack.c.b16 %v1304, %v1303
  %v1315 = vpack.c.b16 %v1306, %v1305
  %v1316 = vpack.c.b16 %v1308, %v1307
  %1325 = vmatprep.subr.bf16.mxu0 0
  %1326 = vmatpush1.bf16.msra.mxu0 %v1309
  %1327 = vmatprep.subr.bf16.mxu0 0
  %1328 = vmatpush1.bf16.msra.mxu0 %v1310
  %1329 = vmatprep.subr.bf16.mxu0 0
  %1330 = vmatpush1.bf16.msra.mxu0 %v1311
  %1331 = vmatprep.subr.bf16.mxu0 0
  %1332 = vmatpush1.bf16.msra.mxu0 %v1312
  %1333 = vmatprep.subr.bf16.mxu0 0
  %1334 = vmatpush1.bf16.msra.mxu0 %v1313
  %1335 = vmatprep.subr.bf16.mxu0 0
  %1336 = vmatpush1.bf16.msra.mxu0 %v1314
  %1337 = vmatprep.subr.bf16.mxu0 0
  %1338 = vmatpush1.bf16.msra.mxu0 %v1315
  %1339 = vmatprep.subr.bf16.mxu0 0
  %1340 = vmatpush1.bf16.msra.mxu0 %v1316
  %1341 = vmatprep.subr.bf16.mxu0 0
  %1342 = vmatpush1.bf16.msra.mxu0 0
  %1343 = vmatprep.subr.bf16.mxu0 0
  %1344 = vmatpush1.bf16.msra.mxu0 0
  %1345 = vmatprep.subr.bf16.mxu0 0
  %1346 = vmatpush1.bf16.msra.mxu0 0
  %1347 = vmatprep.subr.bf16.mxu0 0
  %1348 = vmatpush1.bf16.msra.mxu0 0
  %1349 = vmatprep.subr.bf16.mxu0 0
  %1350 = vmatpush1.bf16.msra.mxu0 0
  %1351 = vmatprep.subr.bf16.mxu0 0
  %1352 = vmatpush1.bf16.msra.mxu0 0
  %1353 = vmatprep.subr.bf16.mxu0 0
  %1354 = vmatpush1.bf16.msra.mxu0 0
  %1355 = vmatprep.subr.bf16.mxu0 0
  %1356 = vmatpush1.bf16.msra.mxu0 0
  %1357 = vmatprep.mubr.bf16.mxu0 0
  %1358 = vmatmul.mubr.bf16.gmra.mrb[0].mxu0 %v1246
  %v1359 = vpop.f32.mrb[0].mxu0
  %v1360 = vadd.f32 %v1275, %v1359
  %v1361 = vpop.f32.mrb[0].mxu0
  %v1362 = vpop.f32.mrb[0].mxu0
  %v1363 = vadd.f32 %v1275, %v1362
  %v1364 = vpop.f32.mrb[0].mxu0
  %1365 = vmatprep.mubr.bf16.mxu0 0
  %1366 = vmatmul.mubr.bf16.gmra.mrb[0].mxu0 %v1247
  %v1367 = vpop.f32.mrb[0].mxu0
  %v1368 = vadd.f32 %v1275, %v1367
  %v1369 = vpop.f32.mrb[0].mxu0
  %v1370 = vpop.f32.mrb[0].mxu0
  %v1371 = vadd.f32 %v1275, %v1370
  %v1372 = vpop.f32.mrb[0].mxu0
  %1373 = vmatprep.mubr.bf16.mxu0 0
  %1374 = vmatmul.mubr.bf16.gmra.mrb[0].mxu0 %v1248
  %v1375 = vpop.f32.mrb[0].mxu0
  %v1376 = vadd.f32 %v1275, %v1375
  %v1377 = vpop.f32.mrb[0].mxu0
  %v1378 = vpop.f32.mrb[0].mxu0
  %v1379 = vadd.f32 %v1275, %v1378
  %v1380 = vpop.f32.mrb[0].mxu0
  %1381 = vmatprep.mubr.bf16.mxu0 0
  %1382 = vmatmul.mubr.bf16.gmra.mrb[0].mxu0 %v1249
  %v1383 = vpop.f32.mrb[0].mxu0
  %v1384 = vadd.f32 %v1275, %v1383
  %v1385 = vpop.f32.mrb[0].mxu0
  %v1386 = vpop.f32.mrb[0].mxu0
  %v1387 = vadd.f32 %v1275, %v1386
  %v1388 = vpop.f32.mrb[0].mxu0
  %1389 = vmatprep.mubr.bf16.mxu0 0
  %1390 = vmatmul.mubr.bf16.gmra.mrb[0].mxu0 %v1250
  %v1391 = vpop.f32.mrb[0].mxu0
  %v1392 = vadd.f32 %v1275, %v1391
  %v1393 = vpop.f32.mrb[0].mxu0
  %v1394 = vpop.f32.mrb[0].mxu0
  %v1395 = vadd.f32 %v1275, %v1394
  %v1396 = vpop.f32.mrb[0].mxu0
  %1397 = vmatprep.mubr.bf16.mxu0 0
  %1398 = vmatmul.mubr.bf16.gmra.mrb[0].mxu0 %v1251
  %v1399 = vpop.f32.mrb[0].mxu0
  %v1400 = vadd.f32 %v1275, %v1399
  %v1401 = vpop.f32.mrb[0].mxu0
  %v1402 = vpop.f32.mrb[0].mxu0
  %v1403 = vadd.f32 %v1275, %v1402
  %v1404 = vpop.f32.mrb[0].mxu0
  %1405 = vmatprep.mubr.bf16.mxu0 0
  %1406 = vmatmul.mubr.bf16.gmra.mrb[0].mxu0 %v1252
  %v1407 = vpop.f32.mrb[0].mxu0
  %v1408 = vadd.f32 %v1275, %v1407
  %v1409 = vpop.f32.mrb[0].mxu0
  %v1410 = vpop.f32.mrb[0].mxu0
  %v1411 = vadd.f32 %v1275, %v1410
  %v1412 = vpop.f32.mrb[0].mxu0
  %1413 = vmatprep.mubr.bf16.mxu0 0
  %1414 = vmatmul.mubr.bf16.gmra.mrb[0].mxu0 %v1253
  %v1415 = vpop.f32.mrb[0].mxu0
  %v1416 = vadd.f32 %v1275, %v1415
  %v1417 = vpop.f32.mrb[0].mxu0
  %v1418 = vpop.f32.mrb[0].mxu0
  %v1419 = vadd.f32 %v1275, %v1418
  %v1420 = vpop.f32.mrb[0].mxu0
  %1421 = vdwg.mxu0
  %v1422 = vxor.u32 %v1360, 2147483648
  %v1423 = vxor.u32 %v1363, 2147483648
  %v1424 = vxor.u32 %v1368, 2147483648
  %v1425 = vxor.u32 %v1371, 2147483648
  %v1426 = vxor.u32 %v1376, 2147483648
  %v1427 = vxor.u32 %v1379, 2147483648
  %v1428 = vxor.u32 %v1384, 2147483648
  %v1429 = vxor.u32 %v1387, 2147483648
  %v1430 = vxor.u32 %v1392, 2147483648
  %v1431 = vxor.u32 %v1395, 2147483648
  %v1432 = vxor.u32 %v1400, 2147483648
  %v1433 = vxor.u32 %v1403, 2147483648
  %v1434 = vxor.u32 %v1408, 2147483648
  %v1435 = vxor.u32 %v1411, 2147483648
  %v1436 = vxor.u32 %v1416, 2147483648
  %v1437 = vxor.u32 %v1419, 2147483648
  %v1438 = vmul.f32 %v1422, 1.442695
  %v1439 = vpow.pop %v1438
  %v1440 = vmul.f32 %v1423, 1.442695
  %v1441 = vpow.pop %v1440
  %v1442 = vmul.f32 %v1424, 1.442695
  %v1443 = vpow.pop %v1442
  %v1444 = vmul.f32 %v1425, 1.442695
  %v1445 = vpow.pop %v1444
  %v1446 = vmul.f32 %v1426, 1.442695
  %v1447 = vpow.pop %v1446
  %v1448 = vmul.f32 %v1427, 1.442695
  %v1449 = vpow.pop %v1448
  %v1450 = vmul.f32 %v1428, 1.442695
  %v1451 = vpow.pop %v1450
  %v1452 = vmul.f32 %v1429, 1.442695
  %v1453 = vpow.pop %v1452
  %v1454 = vmul.f32 %v1430, 1.442695
  %v1455 = vpow.pop %v1454
  %v1456 = vmul.f32 %v1431, 1.442695
  %v1457 = vpow.pop %v1456
  %v1458 = vmul.f32 %v1432, 1.442695
  %v1459 = vpow.pop %v1458
  %v1460 = vmul.f32 %v1433, 1.442695
  %v1461 = vpow.pop %v1460
  %v1462 = vmul.f32 %v1434, 1.442695
  %v1463 = vpow.pop %v1462
  %v1464 = vmul.f32 %v1435, 1.442695
  %v1465 = vpow.pop %v1464
  %v1466 = vmul.f32 %v1436, 1.442695
  %v1467 = vpow.pop %v1466
  %v1468 = vmul.f32 %v1437, 1.442695
  %v1469 = vpow.pop %v1468
  %v1470 = vadd.f32 %v1439, 1.0
  %v1471 = vadd.f32 %v1441, 1.0
  %v1472 = vadd.f32 %v1443, 1.0
  %v1473 = vadd.f32 %v1445, 1.0
  %v1474 = vadd.f32 %v1447, 1.0
  %v1475 = vadd.f32 %v1449, 1.0
  %v1476 = vadd.f32 %v1451, 1.0
  %v1477 = vadd.f32 %v1453, 1.0
  %v1478 = vadd.f32 %v1455, 1.0
  %v1479 = vadd.f32 %v1457, 1.0
  %v1480 = vadd.f32 %v1459, 1.0
  %v1481 = vadd.f32 %v1461, 1.0
  %v1482 = vadd.f32 %v1463, 1.0
  %v1483 = vadd.f32 %v1465, 1.0
  %v1484 = vadd.f32 %v1467, 1.0
  %v1485 = vadd.f32 %v1469, 1.0
  %v1486 = vrcp.pop %v1470
  %v1487 = vmul.f32 1.0, %v1486
  %v1488 = vrcp.pop %v1471
  %v1489 = vmul.f32 1.0, %v1488
  %v1490 = vrcp.pop %v1472
  %v1491 = vmul.f32 1.0, %v1490
  %v1492 = vrcp.pop %v1473
  %v1493 = vmul.f32 1.0, %v1492
  %v1494 = vrcp.pop %v1474
  %v1495 = vmul.f32 1.0, %v1494
  %v1496 = vrcp.pop %v1475
  %v1497 = vmul.f32 1.0, %v1496
  %v1498 = vrcp.pop %v1476
  %v1499 = vmul.f32 1.0, %v1498
  %v1500 = vrcp.pop %v1477
  %v1501 = vmul.f32 1.0, %v1500
  %v1502 = vrcp.pop %v1478
  %v1503 = vmul.f32 1.0, %v1502
  %v1504 = vrcp.pop %v1479
  %v1505 = vmul.f32 1.0, %v1504
  %v1506 = vrcp.pop %v1480
  %v1507 = vmul.f32 1.0, %v1506
  %v1508 = vrcp.pop %v1481
  %v1509 = vmul.f32 1.0, %v1508
  %v1510 = vrcp.pop %v1482
  %v1511 = vmul.f32 1.0, %v1510
  %v1512 = vrcp.pop %v1483
  %v1513 = vmul.f32 1.0, %v1512
  %v1514 = vrcp.pop %v1484
  %v1515 = vmul.f32 1.0, %v1514
  %v1516 = vrcp.pop %v1485
  %v1517 = vmul.f32 1.0, %v1516
  %1518 = vst [vmem:[%s11] sm:$0xff] %v1487
  %1519 = vst [vmem:[%s11 + $0x8] sm:$0xff] %v1489
  %1520 = vst [vmem:[%s11 + $0x10] sm:$0xff] %v1491
  %1521 = vst [vmem:[%s11 + $0x18] sm:$0xff] %v1493
  %1522 = vst [vmem:[%s11 + $0x20] sm:$0xff] %v1495
  %1523 = vst [vmem:[%s11 + $0x28] sm:$0xff] %v1497
  %1524 = vst [vmem:[%s11 + $0x30] sm:$0xff] %v1499
  %1525 = vst [vmem:[%s11 + $0x38] sm:$0xff] %v1501
  %1526 = vst [vmem:[%s11 + $0x40] sm:$0xff] %v1503
  %1527 = vst [vmem:[%s11 + $0x48] sm:$0xff] %v1505
  %1528 = vst [vmem:[%s11 + $0x50] sm:$0xff] %v1507
  %1529 = vst [vmem:[%s11 + $0x58] sm:$0xff] %v1509
  %1530 = vst [vmem:[%s11 + $0x60] sm:$0xff] %v1511
  %1531 = vst [vmem:[%s11 + $0x68] sm:$0xff] %v1513
  %1532 = vst [vmem:[%s11 + $0x70] sm:$0xff] %v1515
  %1533 = vst [vmem:[%s11 + $0x78] sm:$0xff] %v1517
  // Predicated region
  $region46: #{deepddi_forward.1} parent=0 // pred_check
    _
  $region47: #{deepddi_forward.1} parent=0 // pred_check_branch
    %1535 = sbr.rel (0) target = $region49
  $region48: #{deepddi_forward.1} parent=0 // pred_region
    _
  $region49: #{deepddi_forward.1} parent=0 // pred_fallthru
    _
  // Predicated region
  $region50: #{deepddi_forward.1} parent=0 // pred_check
    _
  $region51: #{deepddi_forward.1} parent=0 // pred_check_branch
    %1537 = sbr.rel (0) target = $region53
  $region52: #{deepddi_forward.1} parent=0 // pred_region
    _
  $region53: #{deepddi_forward.1} parent=0 // pred_fallthru
    _

</llo_original>
